<compile_context>
chip_gen: v7x
topology: tpu7x:2x2x1
jax: 0.10.0
libtpu: 0.0.40
codegen_flags: <defaults>
</compile_context>

<pallas_src>
import functools

import jax
import jax.numpy as jnp
from jax.experimental import pallas as pl
from jax.experimental.pallas import tpu as pltpu

N_FEATURE = 8
N_HIDDEN = 128
N_OUTPUT = 1
W_LAYERS = 3                                      # hidden Linear+ReLU layers ("w")
_TILE_CANDIDATES = (4096, 2048, 1024, 512, 256, 128)   # batch tile (lanes), largest first


def _pick_tile(b_padded):
    """b_padded is a multiple of 128.  Prefer the largest tile that still leaves
    >= 2 grid steps (keeps both v7x TensorCores busy); else largest divisor."""
    for tm in _TILE_CANDIDATES:
        if b_padded % tm == 0 and b_padded // tm >= 2:
            return tm
    for tm in _TILE_CANDIDATES:
        if b_padded % tm == 0:
            return tm
    return b_padded  # unreachable once b_padded is a multiple of 128


def mlp_kernel(xt_ref, w1_ref, b1_ref, wh_ref, bh_ref, wo_ref, bo_ref, ot_ref):
    mdt = wh_ref.dtype  # bf16 (fast path) or f32 (parity path); accumulation is f32 either way
    # inputnet: h = relu(W1 @ x_t + b1), batch on lanes.
    h = jnp.dot(w1_ref[...], xt_ref[...], preferred_element_type=jnp.float32)
    h = jnp.maximum(h + b1_ref[...], 0.0)
    # hiddens: W_LAYERS x (Linear + ReLU); resident weights, full-width MXU matmuls.
    for i in range(W_LAYERS):
        h = jnp.dot(wh_ref[i], h.astype(mdt), preferred_element_type=jnp.float32)
        h = jnp.maximum(h + bh_ref[i], 0.0)
    # outputnet: n_output == 1 -> VPU multiply + sublane reduce (MXU stays free),
    # producing a lane-dense (1, TM) row directly.
    if N_OUTPUT == 1:
        out = jnp.sum(wo_ref[...] * h, axis=0, keepdims=True)
    else:  # generic fallback: (H, N_OUT)^T @ (H, TM) -> (N_OUT, TM)
        out = jax.lax.dot_general(wo_ref[...], h, (((0,), (0,)), ((), ())),
                                  preferred_element_type=jnp.float32)
    ot_ref[...] = (out + bo_ref[...]).astype(ot_ref.dtype)


@functools.partial(jax.jit, static_argnames=("use_bf16",))
def net_forward(x, w1, b1, wh, bh, wo, bo, use_bf16=True):
    """x: (B, n_feature).  Params use PyTorch [out, in] layout; biases as columns."""
    B = x.shape[0]
    b_pad = ((B + 127) // 128) * 128          # lane-dense stores, bounded VMEM for any B
    tm = _pick_tile(b_pad)
    grid = (b_pad // tm,)

    xt = x.T                                   # (n_feature, B): batch on lanes
    if b_pad != B:
        xt = jnp.pad(xt, ((0, 0), (0, b_pad - B)))

    mdt = jnp.bfloat16 if use_bf16 else jnp.float32
    xt_m = xt.astype(mdt)                      # MXU operands in bf16 (f32 accumulate)
    w1_m = w1.astype(mdt)
    wh_m = wh.astype(mdt)

    flops = 2 * b_pad * (N_FEATURE * N_HIDDEN
                         + W_LAYERS * N_HIDDEN * N_HIDDEN
                         + N_HIDDEN * N_OUTPUT)
    ebytes = 2 if use_bf16 else 4
    bytes_accessed = (ebytes * (xt_m.size + w1_m.size + wh_m.size)
                      + 4 * (b1.size + bh.size + wo.size + bo.size + b_pad * N_OUTPUT))

    out_t = pl.pallas_call(
        mlp_kernel,
        out_shape=jax.ShapeDtypeStruct((N_OUTPUT, b_pad), jnp.float32),
        grid_spec=pltpu.PrefetchScalarGridSpec(
            num_scalar_prefetch=0,
            grid=grid,
            in_specs=[
                pl.BlockSpec((N_FEATURE, tm), lambda i: (0, i)),                   # x.T tile
                pl.BlockSpec((N_HIDDEN, N_FEATURE), lambda i: (0, 0)),             # W1 [out,in]
                pl.BlockSpec((N_HIDDEN, 1), lambda i: (0, 0)),                     # b1 column
                pl.BlockSpec((W_LAYERS, N_HIDDEN, N_HIDDEN), lambda i: (0, 0, 0)), # Wh [out,in]
                pl.BlockSpec((W_LAYERS, N_HIDDEN, 1), lambda i: (0, 0, 0)),        # bh columns
                pl.BlockSpec((N_HIDDEN, N_OUTPUT), lambda i: (0, 0)),              # Wo column (f32)
                pl.BlockSpec((N_OUTPUT, 1), lambda i: (0, 0)),                     # bo
            ],
            out_specs=pl.BlockSpec((N_OUTPUT, tm), lambda i: (0, i)),              # lane-dense out
        ),
        compiler_params=pltpu.CompilerParams(
            dimension_semantics=("parallel",),
            vmem_limit_bytes=48 * 1024 * 1024),
        cost_estimate=pl.CostEstimate(flops=flops, transcendentals=0,
                                      bytes_accessed=bytes_accessed),
    )(xt_m, w1_m, b1, wh_m, bh, wo, bo)
    return out_t[:, :B].T                      # (B, n_output)


def init_params(key):
    """Deterministic params; shapes/layouts mirror PyTorch nn.Linear ([out, in])."""
    ks = jax.random.split(key, 6)
    w1 = jax.random.normal(ks[0], (N_HIDDEN, N_FEATURE), jnp.float32) * (2.0 / N_FEATURE) ** 0.5
    b1 = 0.1 * jax.random.normal(ks[1], (N_HIDDEN, 1), jnp.float32)
    wh = jax.random.normal(ks[2], (W_LAYERS, N_HIDDEN, N_HIDDEN), jnp.float32) * (2.0 / N_HIDDEN) ** 0.5
    bh = 0.1 * jax.random.normal(ks[3], (W_LAYERS, N_HIDDEN, 1), jnp.float32)
    wo = jax.random.normal(ks[4], (N_HIDDEN, N_OUTPUT), jnp.float32) * (2.0 / N_HIDDEN) ** 0.5  # = outputnet.weight.T
    bo = 0.1 * jax.random.normal(ks[5], (N_OUTPUT, 1), jnp.float32)
    return w1, b1, wh, bh, wo, bo


def reference_forward(x, w1, b1, wh, bh, wo, bo, use_bf16=True):
    """Plain-JAX reference applying the same operand casts as the kernel."""
    mdt = jnp.bfloat16 if use_bf16 else jnp.float32
    h = jnp.dot(x.astype(mdt), w1.T.astype(mdt), preferred_element_type=jnp.float32) + b1[:, 0]
    h = jnp.maximum(h, 0.0)
    for i in range(W_LAYERS):
        h = jnp.dot(h.astype(mdt), wh[i].T.astype(mdt),
                    preferred_element_type=jnp.float32) + bh[i, :, 0]
        h = jnp.maximum(h, 0.0)
    return h @ wo + bo[:, 0]


if __name__ == "__main__":
    key = jax.random.PRNGKey(0)
    kx, kp = jax.random.split(key)
    params = init_params(kp)

    # B=256: tiled path with >=2 grid steps; B=16 / B=3: padded small-batch paths.
    for B in (256, 16, 3):
        x = jax.random.normal(jax.random.fold_in(kx, B), (B, N_FEATURE), jnp.float32)

        # Fast path: bf16 MXU operands, f32 accumulation.
        out = jax.block_until_ready(net_forward(x, *params, use_bf16=True))
        ref = reference_forward(x, *params, use_bf16=True)
        assert out.shape == (B, N_OUTPUT), out.shape
        assert jnp.allclose(out, ref, atol=2e-3, rtol=2e-3), f"bf16 mismatch (B={B})"

        # f32 parity path: matches the original f32 PyTorch module semantics.
        out32 = jax.block_until_ready(net_forward(x, *params, use_bf16=False))
        ref32 = reference_forward(x, *params, use_bf16=False)
        assert jnp.allclose(out32, ref32, atol=1e-4, rtol=1e-4), f"f32 mismatch (B={B})"

    print("KERNEL_OK")
</pallas_src>

<mosaic_0001>
module attributes {stable_mosaic.version = 11 : i64} {
  func.func @mlp_kernel(%arg0: i32, %arg1: memref<8x128xbf16, #tpu.memory_space<vmem>>, %arg2: memref<128x8xbf16, #tpu.memory_space<vmem>>, %arg3: memref<128x1xf32, #tpu.memory_space<vmem>>, %arg4: memref<3x128x128xbf16, #tpu.memory_space<vmem>>, %arg5: memref<3x128x1xf32, #tpu.memory_space<vmem>>, %arg6: memref<128x1xf32, #tpu.memory_space<vmem>>, %arg7: memref<1x1xf32, #tpu.memory_space<vmem>>, %arg8: memref<1x128xf32, #tpu.memory_space<vmem>>) attributes {dimension_semantics = [#tpu.dimension_semantics<parallel>], iteration_bounds = array<i64: 2>, scalar_prefetch = 0 : i64, scratch_operands = 0 : i64, tpu.core_type = #tpu.core_type<tc>, window_params = [{transform_indices = @transform_0, window_bounds = array<i64: 8, 128>}, {pipeline_mode = #tpu.pipeline_mode<synchronous>, transform_indices = @transform_1, window_bounds = array<i64: 128, 8>}, {pipeline_mode = #tpu.pipeline_mode<synchronous>, transform_indices = @transform_2, window_bounds = array<i64: 128, 1>}, {pipeline_mode = #tpu.pipeline_mode<synchronous>, transform_indices = @transform_3, window_bounds = array<i64: 3, 128, 128>}, {pipeline_mode = #tpu.pipeline_mode<synchronous>, transform_indices = @transform_4, window_bounds = array<i64: 3, 128, 1>}, {pipeline_mode = #tpu.pipeline_mode<synchronous>, transform_indices = @transform_5, window_bounds = array<i64: 128, 1>}, {pipeline_mode = #tpu.pipeline_mode<synchronous>, transform_indices = @transform_6, window_bounds = array<i64: 1, 1>}, {transform_indices = @transform_7, window_bounds = array<i64: 1, 128>}]} {
    %c0 = arith.constant 0 : index
    %c0_0 = arith.constant 0 : index
    %0 = vector.load %arg2[%c0, %c0_0] : memref<128x8xbf16, #tpu.memory_space<vmem>>, vector<128x8xbf16>
    %c0_1 = arith.constant 0 : index
    %c0_2 = arith.constant 0 : index
    %1 = vector.load %arg1[%c0_1, %c0_2] : memref<8x128xbf16, #tpu.memory_space<vmem>>, vector<8x128xbf16>
    %cst = arith.constant dense<0.000000e+00> : vector<128x128xf32>
    %2 = tpu.matmul %0, %1, %cst {dimension_numbers = #tpu.dot_dimension_numbers<[1], [0], [0], [1], [0, 0, 1, 1], [], []>} : vector<128x8xbf16>, vector<8x128xbf16>, vector<128x128xf32> -> vector<128x128xf32>
    %c0_3 = arith.constant 0 : index
    %c0_4 = arith.constant 0 : index
    %3 = vector.load %arg3[%c0_3, %c0_4] : memref<128x1xf32, #tpu.memory_space<vmem>>, vector<128x1xf32>
    %4 = vector.broadcast %3 : vector<128x1xf32> to vector<128x128xf32>
    %5 = arith.addf %2, %4 : vector<128x128xf32>
    %cst_5 = arith.constant 0.000000e+00 : f32
    %6 = vector.broadcast %cst_5 : f32 to vector<128x128xf32>
    %7 = arith.maximumf %5, %6 : vector<128x128xf32>
    %c0_6 = arith.constant 0 : index
    %c0_7 = arith.constant 0 : index
    %c0_8 = arith.constant 0 : index
    %8 = vector.load %arg4[%c0_6, %c0_7, %c0_8] : memref<3x128x128xbf16, #tpu.memory_space<vmem>>, vector<1x128x128xbf16>
    %9 = vector.shape_cast %8 : vector<1x128x128xbf16> to vector<128x128xbf16>
    %10 = arith.truncf %7 : vector<128x128xf32> to vector<128x128xbf16>
    %cst_9 = arith.constant dense<0.000000e+00> : vector<128x128xf32>
    %11 = tpu.matmul %9, %10, %cst_9 {dimension_numbers = #tpu.dot_dimension_numbers<[1], [0], [0], [1], [0, 0, 1, 1], [], []>} : vector<128x128xbf16>, vector<128x128xbf16>, vector<128x128xf32> -> vector<128x128xf32>
    %c0_10 = arith.constant 0 : index
    %c0_11 = arith.constant 0 : index
    %c0_12 = arith.constant 0 : index
    %12 = vector.load %arg5[%c0_10, %c0_11, %c0_12] : memref<3x128x1xf32, #tpu.memory_space<vmem>>, vector<1x128x1xf32>
    %13 = vector.shape_cast %12 : vector<1x128x1xf32> to vector<128x1xf32>
    %14 = vector.broadcast %13 : vector<128x1xf32> to vector<128x128xf32>
    %15 = arith.addf %11, %14 : vector<128x128xf32>
    %cst_13 = arith.constant 0.000000e+00 : f32
    %16 = vector.broadcast %cst_13 : f32 to vector<128x128xf32>
    %17 = arith.maximumf %15, %16 : vector<128x128xf32>
    %c1 = arith.constant 1 : index
    %c0_14 = arith.constant 0 : index
    %c0_15 = arith.constant 0 : index
    %18 = vector.load %arg4[%c1, %c0_14, %c0_15] : memref<3x128x128xbf16, #tpu.memory_space<vmem>>, vector<1x128x128xbf16>
    %19 = vector.shape_cast %18 : vector<1x128x128xbf16> to vector<128x128xbf16>
    %20 = arith.truncf %17 : vector<128x128xf32> to vector<128x128xbf16>
    %cst_16 = arith.constant dense<0.000000e+00> : vector<128x128xf32>
    %21 = tpu.matmul %19, %20, %cst_16 {dimension_numbers = #tpu.dot_dimension_numbers<[1], [0], [0], [1], [0, 0, 1, 1], [], []>} : vector<128x128xbf16>, vector<128x128xbf16>, vector<128x128xf32> -> vector<128x128xf32>
    %c1_17 = arith.constant 1 : index
    %c0_18 = arith.constant 0 : index
    %c0_19 = arith.constant 0 : index
    %22 = vector.load %arg5[%c1_17, %c0_18, %c0_19] : memref<3x128x1xf32, #tpu.memory_space<vmem>>, vector<1x128x1xf32>
    %23 = vector.shape_cast %22 : vector<1x128x1xf32> to vector<128x1xf32>
    %24 = vector.broadcast %23 : vector<128x1xf32> to vector<128x128xf32>
    %25 = arith.addf %21, %24 : vector<128x128xf32>
    %cst_20 = arith.constant 0.000000e+00 : f32
    %26 = vector.broadcast %cst_20 : f32 to vector<128x128xf32>
    %27 = arith.maximumf %25, %26 : vector<128x128xf32>
    %c2 = arith.constant 2 : index
    %c0_21 = arith.constant 0 : index
    %c0_22 = arith.constant 0 : index
    %28 = vector.load %arg4[%c2, %c0_21, %c0_22] : memref<3x128x128xbf16, #tpu.memory_space<vmem>>, vector<1x128x128xbf16>
    %29 = vector.shape_cast %28 : vector<1x128x128xbf16> to vector<128x128xbf16>
    %30 = arith.truncf %27 : vector<128x128xf32> to vector<128x128xbf16>
    %cst_23 = arith.constant dense<0.000000e+00> : vector<128x128xf32>
    %31 = tpu.matmul %29, %30, %cst_23 {dimension_numbers = #tpu.dot_dimension_numbers<[1], [0], [0], [1], [0, 0, 1, 1], [], []>} : vector<128x128xbf16>, vector<128x128xbf16>, vector<128x128xf32> -> vector<128x128xf32>
    %c2_24 = arith.constant 2 : index
    %c0_25 = arith.constant 0 : index
    %c0_26 = arith.constant 0 : index
    %32 = vector.load %arg5[%c2_24, %c0_25, %c0_26] : memref<3x128x1xf32, #tpu.memory_space<vmem>>, vector<1x128x1xf32>
    %33 = vector.shape_cast %32 : vector<1x128x1xf32> to vector<128x1xf32>
    %34 = vector.broadcast %33 : vector<128x1xf32> to vector<128x128xf32>
    %35 = arith.addf %31, %34 : vector<128x128xf32>
    %cst_27 = arith.constant 0.000000e+00 : f32
    %36 = vector.broadcast %cst_27 : f32 to vector<128x128xf32>
    %37 = arith.maximumf %35, %36 : vector<128x128xf32>
    %c0_28 = arith.constant 0 : index
    %c0_29 = arith.constant 0 : index
    %38 = vector.load %arg6[%c0_28, %c0_29] : memref<128x1xf32, #tpu.memory_space<vmem>>, vector<128x1xf32>
    %39 = vector.broadcast %38 : vector<128x1xf32> to vector<128x128xf32>
    %40 = arith.mulf %39, %37 : vector<128x128xf32>
    %cst_30 = arith.constant dense<0.000000e+00> : vector<128xf32>
    %41 = vector.multi_reduction <add>, %40, %cst_30 [0] : vector<128x128xf32> to vector<128xf32>
    %42 = vector.shape_cast %41 : vector<128xf32> to vector<1x128xf32>
    %c0_31 = arith.constant 0 : index
    %c0_32 = arith.constant 0 : index
    %43 = vector.load %arg7[%c0_31, %c0_32] : memref<1x1xf32, #tpu.memory_space<vmem>>, vector<1x1xf32>
    %44 = vector.broadcast %43 : vector<1x1xf32> to vector<1x128xf32>
    %45 = arith.addf %42, %44 : vector<1x128xf32>
    %c0_33 = arith.constant 0 : index
    %c0_34 = arith.constant 0 : index
    %46 = vector.load %arg8[%c0_33, %c0_34] : memref<1x128xf32, #tpu.memory_space<vmem>>, vector<1x128xf32>
    tpu.vector_store %arg8[%c0_33, %c0_34], %45 {strides = array<i32>} : memref<1x128xf32, #tpu.memory_space<vmem>>, vector<1x128xf32>,
    return
  }
  func.func @transform_0(%arg0: i32) -> (i32, i32) {
    %c0_i32 = arith.constant 0 : i32
    %c0_i32_0 = arith.constant 0 : i32
    return %c0_i32, %arg0 : i32, i32
  }
  func.func @transform_1(%arg0: i32) -> (i32, i32) {
    %c0_i32 = arith.constant 0 : i32
    %c0_i32_0 = arith.constant 0 : i32
    %c0_i32_1 = arith.constant 0 : i32
    return %c0_i32, %c0_i32_0 : i32, i32
  }
  func.func @transform_2(%arg0: i32) -> (i32, i32) {
    %c0_i32 = arith.constant 0 : i32
    %c0_i32_0 = arith.constant 0 : i32
    %c0_i32_1 = arith.constant 0 : i32
    return %c0_i32, %c0_i32_0 : i32, i32
  }
  func.func @transform_3(%arg0: i32) -> (i32, i32, i32) {
    %c0_i32 = arith.constant 0 : i32
    %c0_i32_0 = arith.constant 0 : i32
    %c0_i32_1 = arith.constant 0 : i32
    %c0_i32_2 = arith.constant 0 : i32
    return %c0_i32, %c0_i32_0, %c0_i32_1 : i32, i32, i32
  }
  func.func @transform_4(%arg0: i32) -> (i32, i32, i32) {
    %c0_i32 = arith.constant 0 : i32
    %c0_i32_0 = arith.constant 0 : i32
    %c0_i32_1 = arith.constant 0 : i32
    %c0_i32_2 = arith.constant 0 : i32
    return %c0_i32, %c0_i32_0, %c0_i32_1 : i32, i32, i32
  }
  func.func @transform_5(%arg0: i32) -> (i32, i32) {
    %c0_i32 = arith.constant 0 : i32
    %c0_i32_0 = arith.constant 0 : i32
    %c0_i32_1 = arith.constant 0 : i32
    return %c0_i32, %c0_i32_0 : i32, i32
  }
  func.func @transform_6(%arg0: i32) -> (i32, i32) {
    %c0_i32 = arith.constant 0 : i32
    %c0_i32_0 = arith.constant 0 : i32
    %c0_i32_1 = arith.constant 0 : i32
    return %c0_i32, %c0_i32_0 : i32, i32
  }
  func.func @transform_7(%arg0: i32) -> (i32, i32) {
    %c0_i32 = arith.constant 0 : i32
    %c0_i32_0 = arith.constant 0 : i32
    return %c0_i32, %arg0 : i32, i32
  }
}

</mosaic_0001>

<llo_original>
// kernel: net_forward.1
$region0: #{net_forward.1}
  #allocation0 [shape = 'u32[]', space=smem, size = 0x4, offset = 0x4, fixed_abs, tag = 'smem constant byte address 0x4 - core index']
  #allocation1 [shape = 'u32[144,128]{1,0:T(1,128)}', space=vmem, size = 0x12000, scoped, tag = 'internal scratch']
  #allocation2 [shape = 'f32[1,1]{1,0:T(1,128)S(1)}', space=vmem, size = 0x200, scoped, tag = 'scoped memory for net_forward.1']
  %s0 = inlined_call_operand.vmem [shape: bf16[8,256], index: 0, kind: input, shape index: {}]
  %s1 = inlined_call_operand.vmem [shape: bf16[128,8], index: 1, kind: input, shape index: {}]
  %s2 = inlined_call_operand.vmem [shape: f32[128,1], index: 2, kind: input, shape index: {}]
  %s3 = inlined_call_operand.vmem [shape: bf16[3,128,128], index: 3, kind: input, shape index: {}]
  %s4 = inlined_call_operand.vmem [shape: f32[3,128,1], index: 4, kind: input, shape index: {}]
  %s5 = inlined_call_operand.vmem [shape: f32[128,1], index: 5, kind: input, shape index: {}]
  %s6 = inlined_call_operand.<no memory space> [shape: f32[1,1], index: 6, kind: input, shape index: {}]
  %s7 = inlined_call_operand.hbm [shape: f32[1,256], index: 7, kind: output, shape index: {}]
  %s8 = sld [smem:[#allocation0]]
  $region61: #{net_forward.1} parent=0
    _
  %s10 = ssub.s32 1, %s8
  %s11 = scalar_select 0, %s10, %s8
  %v12 = vstv %s6
  %13 = vst [vmem:[#allocation2] sm:$0x1] %v12
  $region1: #{net_forward.1} parent=0
    #allocation3 [shape = 'u8[1024]{0}', space=vmem, size = 0x400, scoped, tag = 'output window, operand 0']
    #allocation4 [shape = 's32[2]{0}', space=sflag, size = 0x8, scoped, tag = 'scoped memory for net_forward.1']
    %14 = vsyncpa [#allocation4], 0
    %s15 = scalar_lea.sflag [#allocation4], 1
    %16 = vsyncpa %s15, 0
    loop: start=0, step=1, limit=4
    $region2: #{net_forward.1} parent=1 // loop_pre_header
      _
    $region3: #{net_forward.1} parent=1 // loop_header
      %s18 = sphi 0, %s22
      %p19 = scmp.ge.s32.totalorder %s18, 4
      %s28 = sphi 0, %s30
      %s31 = sphi 0, %s28
      %s32 = sphi 0, %s31
      %s48 = sphi 0, %s32
      %s52 = sphi 0, %s52
      %s54 = sphi 0, %s52
      %s55 = sphi 0, %s54
      %s69 = sphi 0, %s55
      %s73 = sphi 0, %s73
      %s75 = sphi 0, %s73
      %s76 = sphi 0, %s75
      %s90 = sphi 0, %s76
      %s94 = sphi 0, %s94
      %s96 = sphi 0, %s94
      %s97 = sphi 0, %s96
      %s111 = sphi 0, %s97
      %s115 = sphi 0, %s115
      %s117 = sphi 0, %s115
      %s118 = sphi 0, %s117
      %s132 = sphi 0, %s118
      %s136 = sphi 0, %s136
      %s138 = sphi 0, %s136
      %s139 = sphi 0, %s138
      %s153 = sphi 0, %s139
      %s157 = sphi 0, %s157
      %s159 = sphi 0, %s157
      %s160 = sphi 0, %s159
      %s174 = sphi 0, %s160
      %s180 = sphi 0, %s182
      %s183 = sphi 0, %s180
      %s184 = sphi 0, %s183
      %s200 = sphi 0, %s184
    $region4: #{net_forward.1} parent=1 // loop_header_branch
      %21 = sbr.rel (%p19) target = $region8
    $region5: #{net_forward.1} parent=1 // loop_body
      %s23 = ssub.s32 %s18, 1
      %s24 = ssub.s32 %s18, 2
      %s25 = sadd.s32 %s18, 1
      %s26 = ssub.s32 %s18, %s25
      %p27 = scmp.eq.s32.totalorder %s26, 0
      %s29 = sadd.s32 %s28, 1
      %s30 = scalar_select %p27, %s28, %s29
      %p33 = pneg %p27
      %p34 = scmp.eq.s32.totalorder %s18, 1
      %p35 = por %p33, %p34
      %p36 = scmp.ne.s32.totalorder %s28, %s31
      %p37 = scmp.eq.s32.totalorder %s18, 0
      %p38 = por %p36, %p37
      %p39 = scmp.ne.s32.totalorder %s28, %s31
      %p40 = scmp.eq.s32.totalorder %s23, 1
      %p41 = por %p39, %p40
      %p42 = scmp.ne.s32.totalorder %s31, %s32
      %p43 = scmp.eq.s32.totalorder %s23, 0
      %p44 = por %p42, %p43
      %p45 = scmp.ne.s32.totalorder %s31, %s32
      %p46 = scmp.eq.s32.totalorder %s24, 1
      %p47 = por %p45, %p46
      %p49 = scmp.ne.s32.totalorder %s32, %s48
      %p50 = scmp.eq.s32.totalorder %s24, 0
      %p51 = por %p49, %p50
      %s53 = sadd.s32 %s52, 1
      %p56 = scmp.eq.s32.totalorder %s18, 1
      %p57 = scmp.ne.s32.totalorder %s52, %s54
      %p58 = scmp.eq.s32.totalorder %s18, 0
      %p59 = por %p57, %p58
      %p60 = scmp.ne.s32.totalorder %s52, %s54
      %p61 = scmp.eq.s32.totalorder %s23, 1
      %p62 = por %p60, %p61
      %p63 = scmp.ne.s32.totalorder %s54, %s55
      %p64 = scmp.eq.s32.totalorder %s23, 0
      %p65 = por %p63, %p64
      %p66 = scmp.ne.s32.totalorder %s54, %s55
      %p67 = scmp.eq.s32.totalorder %s24, 1
      %p68 = por %p66, %p67
      %p70 = scmp.ne.s32.totalorder %s55, %s69
      %p71 = scmp.eq.s32.totalorder %s24, 0
      %p72 = por %p70, %p71
      %s74 = sadd.s32 %s73, 1
      %p77 = scmp.eq.s32.totalorder %s18, 1
      %p78 = scmp.ne.s32.totalorder %s73, %s75
      %p79 = scmp.eq.s32.totalorder %s18, 0
      %p80 = por %p78, %p79
      %p81 = scmp.ne.s32.totalorder %s73, %s75
      %p82 = scmp.eq.s32.totalorder %s23, 1
      %p83 = por %p81, %p82
      %p84 = scmp.ne.s32.totalorder %s75, %s76
      %p85 = scmp.eq.s32.totalorder %s23, 0
      %p86 = por %p84, %p85
      %p87 = scmp.ne.s32.totalorder %s75, %s76
      %p88 = scmp.eq.s32.totalorder %s24, 1
      %p89 = por %p87, %p88
      %p91 = scmp.ne.s32.totalorder %s76, %s90
      %p92 = scmp.eq.s32.totalorder %s24, 0
      %p93 = por %p91, %p92
      %s95 = sadd.s32 %s94, 1
      %p98 = scmp.eq.s32.totalorder %s18, 1
      %p99 = scmp.ne.s32.totalorder %s94, %s96
      %p100 = scmp.eq.s32.totalorder %s18, 0
      %p101 = por %p99, %p100
      %p102 = scmp.ne.s32.totalorder %s94, %s96
      %p103 = scmp.eq.s32.totalorder %s23, 1
      %p104 = por %p102, %p103
      %p105 = scmp.ne.s32.totalorder %s96, %s97
      %p106 = scmp.eq.s32.totalorder %s23, 0
      %p107 = por %p105, %p106
      %p108 = scmp.ne.s32.totalorder %s96, %s97
      %p109 = scmp.eq.s32.totalorder %s24, 1
      %p110 = por %p108, %p109
      %p112 = scmp.ne.s32.totalorder %s97, %s111
      %p113 = scmp.eq.s32.totalorder %s24, 0
      %p114 = por %p112, %p113
      %s116 = sadd.s32 %s115, 1
      %p119 = scmp.eq.s32.totalorder %s18, 1
      %p120 = scmp.ne.s32.totalorder %s115, %s117
      %p121 = scmp.eq.s32.totalorder %s18, 0
      %p122 = por %p120, %p121
      %p123 = scmp.ne.s32.totalorder %s115, %s117
      %p124 = scmp.eq.s32.totalorder %s23, 1
      %p125 = por %p123, %p124
      %p126 = scmp.ne.s32.totalorder %s117, %s118
      %p127 = scmp.eq.s32.totalorder %s23, 0
      %p128 = por %p126, %p127
      %p129 = scmp.ne.s32.totalorder %s117, %s118
      %p130 = scmp.eq.s32.totalorder %s24, 1
      %p131 = por %p129, %p130
      %p133 = scmp.ne.s32.totalorder %s118, %s132
      %p134 = scmp.eq.s32.totalorder %s24, 0
      %p135 = por %p133, %p134
      %s137 = sadd.s32 %s136, 1
      %p140 = scmp.eq.s32.totalorder %s18, 1
      %p141 = scmp.ne.s32.totalorder %s136, %s138
      %p142 = scmp.eq.s32.totalorder %s18, 0
      %p143 = por %p141, %p142
      %p144 = scmp.ne.s32.totalorder %s136, %s138
      %p145 = scmp.eq.s32.totalorder %s23, 1
      %p146 = por %p144, %p145
      %p147 = scmp.ne.s32.totalorder %s138, %s139
      %p148 = scmp.eq.s32.totalorder %s23, 0
      %p149 = por %p147, %p148
      %p150 = scmp.ne.s32.totalorder %s138, %s139
      %p151 = scmp.eq.s32.totalorder %s24, 1
      %p152 = por %p150, %p151
      %p154 = scmp.ne.s32.totalorder %s139, %s153
      %p155 = scmp.eq.s32.totalorder %s24, 0
      %p156 = por %p154, %p155
      %s158 = sadd.s32 %s157, 1
      %p161 = scmp.eq.s32.totalorder %s18, 1
      %p162 = scmp.ne.s32.totalorder %s157, %s159
      %p163 = scmp.eq.s32.totalorder %s18, 0
      %p164 = por %p162, %p163
      %p165 = scmp.ne.s32.totalorder %s157, %s159
      %p166 = scmp.eq.s32.totalorder %s23, 1
      %p167 = por %p165, %p166
      %p168 = scmp.ne.s32.totalorder %s159, %s160
      %p169 = scmp.eq.s32.totalorder %s23, 0
      %p170 = por %p168, %p169
      %p171 = scmp.ne.s32.totalorder %s159, %s160
      %p172 = scmp.eq.s32.totalorder %s24, 1
      %p173 = por %p171, %p172
      %p175 = scmp.ne.s32.totalorder %s160, %s174
      %p176 = scmp.eq.s32.totalorder %s24, 0
      %p177 = por %p175, %p176
      %s178 = ssub.s32 %s18, %s25
      %p179 = scmp.eq.s32.totalorder %s178, 0
      %s181 = sadd.s32 %s180, 1
      %s182 = scalar_select %p179, %s180, %s181
      %p185 = pneg %p179
      %p186 = scmp.eq.s32.totalorder %s18, 1
      %p187 = por %p185, %p186
      %p188 = scmp.ne.s32.totalorder %s180, %s183
      %p189 = scmp.eq.s32.totalorder %s18, 0
      %p190 = por %p188, %p189
      %p191 = scmp.ne.s32.totalorder %s180, %s183
      %p192 = scmp.eq.s32.totalorder %s23, 1
      %p193 = por %p191, %p192
      %p194 = scmp.ne.s32.totalorder %s183, %s184
      %p195 = scmp.eq.s32.totalorder %s23, 0
      %p196 = por %p194, %p195
      %p197 = scmp.ne.s32.totalorder %s183, %s184
      %p198 = scmp.eq.s32.totalorder %s24, 1
      %p199 = por %p197, %p198
      %p201 = scmp.ne.s32.totalorder %s184, %s200
      %p202 = scmp.eq.s32.totalorder %s24, 0
      %p203 = por %p201, %p202
      %p204 = scmp.le.s32.totalorder 1, %s18
      %p205 = scmp.lt.s32.totalorder %s18, 3
      %p206 = pnand %p204, %p205
      %p207 = pneg %p206
      // Predicated region
      $region9: #{net_forward.1} parent=5 // pred_check
        _
      $region10: #{net_forward.1} parent=5 // pred_check_branch
        %209 = sbr.rel (%p206) target = $region12
      $region11: #{net_forward.1} parent=5 // pred_region
        %s210 = ssub.s32 %s18, 1
        // Predicated region
        $region13: #{net_forward.1} parent=11 // pred_check
          %p211 = pneg %p65
        $region14: #{net_forward.1} parent=11 // pred_check_branch
          %213 = sbr.rel (%p211) target = $region16
        $region15: #{net_forward.1} parent=11 // pred_region
          _
        $region16: #{net_forward.1} parent=11 // pred_fallthru
          _
        // Predicated region
        $region17: #{net_forward.1} parent=11 // pred_check
          %p214 = pneg %p86
        $region18: #{net_forward.1} parent=11 // pred_check_branch
          %216 = sbr.rel (%p214) target = $region20
        $region19: #{net_forward.1} parent=11 // pred_region
          _
        $region20: #{net_forward.1} parent=11 // pred_fallthru
          _
        // Predicated region
        $region21: #{net_forward.1} parent=11 // pred_check
          %p217 = pneg %p107
        $region22: #{net_forward.1} parent=11 // pred_check_branch
          %219 = sbr.rel (%p217) target = $region24
        $region23: #{net_forward.1} parent=11 // pred_region
          _
        $region24: #{net_forward.1} parent=11 // pred_fallthru
          _
        // Predicated region
        $region25: #{net_forward.1} parent=11 // pred_check
          %p220 = pneg %p128
        $region26: #{net_forward.1} parent=11 // pred_check_branch
          %222 = sbr.rel (%p220) target = $region28
        $region27: #{net_forward.1} parent=11 // pred_region
          _
        $region28: #{net_forward.1} parent=11 // pred_fallthru
          _
        // Predicated region
        $region29: #{net_forward.1} parent=11 // pred_check
          %p223 = pneg %p149
        $region30: #{net_forward.1} parent=11 // pred_check_branch
          %225 = sbr.rel (%p223) target = $region32
        $region31: #{net_forward.1} parent=11 // pred_region
          _
        $region32: #{net_forward.1} parent=11 // pred_fallthru
          _
        // Predicated region
        $region33: #{net_forward.1} parent=11 // pred_check
          %p226 = pneg %p170
        $region34: #{net_forward.1} parent=11 // pred_check_branch
          %228 = sbr.rel (%p226) target = $region36
        $region35: #{net_forward.1} parent=11 // pred_region
          _
        $region36: #{net_forward.1} parent=11 // pred_fallthru
          _
      $region12: #{net_forward.1} parent=5 // pred_fallthru
        _
      %p229 = scmp.lt.s32.totalorder %s18, 2
      // Predicated region
      $region37: #{net_forward.1} parent=5 // pred_check
        %p230 = pneg %p229
      $region38: #{net_forward.1} parent=5 // pred_check_branch
        %232 = sbr.rel (%p230) target = $region40
      $region39: #{net_forward.1} parent=5 // pred_region
        // Predicated region
        $region41: #{net_forward.1} parent=39 // pred_check
          %p233 = pneg %p38
        $region42: #{net_forward.1} parent=39 // pred_check_branch
          %235 = sbr.rel (%p233) target = $region44
        $region43: #{net_forward.1} parent=39 // pred_region
          %p236 = scmp.lt.s32.totalorder %s18, 1
          %s237 = scalar_select %p236, %s18, 1
          %s238 = smul.addr %s237, 4
          %s239 = scalar_lea.vmem %s0, %s238
        $region44: #{net_forward.1} parent=39 // pred_fallthru
          _
      $region40: #{net_forward.1} parent=5 // pred_fallthru
        _
      %p240 = scmp.le.s32.totalorder 1, %s18
      %p241 = scmp.lt.s32.totalorder %s18, 3
      %p242 = pnand %p240, %p241
      %p243 = pneg %p242
      // Predicated region
      $region45: #{net_forward.1} parent=5 // pred_check
        _
      $region46: #{net_forward.1} parent=5 // pred_check_branch
        %245 = sbr.rel (%p242) target = $region48
      $region47: #{net_forward.1} parent=5 // pred_region
        %s246 = ssub.s32 %s18, 1
        %p247 = scmp.lt.s32.totalorder %s23, 1
        %s248 = scalar_select %p247, %s23, 1
        %s249 = smul.addr %s248, 4
        %s250 = scalar_lea.vmem %s0, %s249
        %p251 = pneg %p44
        %p252 = pneg %p41
        %p253 = pneg %p65
        %p254 = pneg %p62
        %p255 = pneg %p86
        %p256 = pneg %p83
        %p257 = pneg %p107
        %p258 = pneg %p104
        %p259 = pneg %p128
        %p260 = pneg %p125
        %p261 = pneg %p149
        %p262 = pneg %p146
        %p263 = pneg %p170
        %p264 = pneg %p167
        %p265 = pneg %p196
        %p266 = pneg %p193
        %s267 = sand.u32 %s183, 1
        %s268 = scalar_lea.sflag [#allocation4], %s267
        %s269 = sand.u32 %s183, 1
        %s270 = scalar_lea.vmem [#allocation3], %s269
        %p271 = scmp.lt.s32.totalorder %s23, 1
        %s272 = scalar_select %p271, %s23, 1
        %s273 = smul.addr %s272, 4
        %s274 = scalar_lea.vmem %s0, %s273
        %v276 = vld [vmem:[%s1] sm:$0xf]
        %v277 = vld [vmem:[%s1 + $0x4] sm:$0xf]
        %v278 = vld [vmem:[%s1 + $0x8] sm:$0xf]
        %v279 = vld [vmem:[%s1 + $0xc] sm:$0xf]
        %v280 = vld [vmem:[%s1 + $0x10] sm:$0xf]
        %v281 = vld [vmem:[%s1 + $0x14] sm:$0xf]
        %v282 = vld [vmem:[%s1 + $0x18] sm:$0xf]
        %v283 = vld [vmem:[%s1 + $0x1c] sm:$0xf]
        %v284 = vld [vmem:[%s1 + $0x20] sm:$0xf]
        %v285 = vld [vmem:[%s1 + $0x24] sm:$0xf]
        %v286 = vld [vmem:[%s1 + $0x28] sm:$0xf]
        %v287 = vld [vmem:[%s1 + $0x2c] sm:$0xf]
        %v288 = vld [vmem:[%s1 + $0x30] sm:$0xf]
        %v289 = vld [vmem:[%s1 + $0x34] sm:$0xf]
        %v290 = vld [vmem:[%s1 + $0x38] sm:$0xf]
        %v291 = vld [vmem:[%s1 + $0x3c] sm:$0xf]
        %v292 = vld [vmem:[%s274] sm:$0xf]
        %v293 = vld [vmem:[%s2] sm:$0xff]
        %v294 = vld [vmem:[%s2 + $0x8] sm:$0xff]
        %v295 = vld [vmem:[%s2 + $0x10] sm:$0xff]
        %v296 = vld [vmem:[%s2 + $0x18] sm:$0xff]
        %v297 = vld [vmem:[%s2 + $0x20] sm:$0xff]
        %v298 = vld [vmem:[%s2 + $0x28] sm:$0xff]
        %v299 = vld [vmem:[%s2 + $0x30] sm:$0xff]
        %v300 = vld [vmem:[%s2 + $0x38] sm:$0xff]
        %v301 = vld [vmem:[%s2 + $0x40] sm:$0xff]
        %v302 = vld [vmem:[%s2 + $0x48] sm:$0xff]
        %v303 = vld [vmem:[%s2 + $0x50] sm:$0xff]
        %v304 = vld [vmem:[%s2 + $0x58] sm:$0xff]
        %v305 = vld [vmem:[%s2 + $0x60] sm:$0xff]
        %v306 = vld [vmem:[%s2 + $0x68] sm:$0xff]
        %v307 = vld [vmem:[%s2 + $0x70] sm:$0xff]
        %v308 = vld [vmem:[%s2 + $0x78] sm:$0xff]
        %310 = vset.pattern.permute.xlu0 0
        %311 = vperm.xlu0 %310, %v293
        %v312 = vpop.permute.xlu0 %311
        %315 = vset.pattern.permute.xlu0 0
        %316 = vperm.xlu0 %315, %v294
        %v317 = vpop.permute.xlu0 %316
        %320 = vset.pattern.permute.xlu0 0
        %321 = vperm.xlu0 %320, %v295
        %v322 = vpop.permute.xlu0 %321
        %325 = vset.pattern.permute.xlu0 0
        %326 = vperm.xlu0 %325, %v296
        %v327 = vpop.permute.xlu0 %326
        %330 = vset.pattern.permute.xlu0 0
        %331 = vperm.xlu0 %330, %v297
        %v332 = vpop.permute.xlu0 %331
        %335 = vset.pattern.permute.xlu0 0
        %336 = vperm.xlu0 %335, %v298
        %v337 = vpop.permute.xlu0 %336
        %340 = vset.pattern.permute.xlu0 0
        %341 = vperm.xlu0 %340, %v299
        %v342 = vpop.permute.xlu0 %341
        %345 = vset.pattern.permute.xlu0 0
        %346 = vperm.xlu0 %345, %v300
        %v347 = vpop.permute.xlu0 %346
        %350 = vset.pattern.permute.xlu0 0
        %351 = vperm.xlu0 %350, %v301
        %v352 = vpop.permute.xlu0 %351
        %355 = vset.pattern.permute.xlu0 0
        %356 = vperm.xlu0 %355, %v302
        %v357 = vpop.permute.xlu0 %356
        %360 = vset.pattern.permute.xlu0 0
        %361 = vperm.xlu0 %360, %v303
        %v362 = vpop.permute.xlu0 %361
        %365 = vset.pattern.permute.xlu0 0
        %366 = vperm.xlu0 %365, %v304
        %v367 = vpop.permute.xlu0 %366
        %370 = vset.pattern.permute.xlu0 0
        %371 = vperm.xlu0 %370, %v305
        %v372 = vpop.permute.xlu0 %371
        %375 = vset.pattern.permute.xlu0 0
        %376 = vperm.xlu0 %375, %v306
        %v377 = vpop.permute.xlu0 %376
        %380 = vset.pattern.permute.xlu0 0
        %381 = vperm.xlu0 %380, %v307
        %v382 = vpop.permute.xlu0 %381
        %385 = vset.pattern.permute.xlu0 0
        %386 = vperm.xlu0 %385, %v308
        %v387 = vpop.permute.xlu0 %386
        %v405 = vunpack.c.l.b16 %v276
        %v406 = vunpack.c.l.b16 %v277
        %v407 = vunpack.c.l.b16 %v278
        %v408 = vunpack.c.l.b16 %v279
        %v409 = vunpack.c.l.b16 %v280
        %v410 = vunpack.c.l.b16 %v281
        %v411 = vunpack.c.l.b16 %v282
        %v412 = vunpack.c.l.b16 %v283
        %v413 = vunpack.c.l.b16 %v284
        %v414 = vunpack.c.l.b16 %v285
        %v415 = vunpack.c.l.b16 %v286
        %v416 = vunpack.c.l.b16 %v287
        %v417 = vunpack.c.l.b16 %v288
        %v418 = vunpack.c.l.b16 %v289
        %v419 = vunpack.c.l.b16 %v290
        %v420 = vunpack.c.l.b16 %v291
        %v421 = vpack.c.b16 %v406, %v405
        %v422 = vpack.c.b16 %v408, %v407
        %v423 = vpack.c.b16 %v410, %v409
        %v424 = vpack.c.b16 %v412, %v411
        %v425 = vpack.c.b16 %v414, %v413
        %v426 = vpack.c.b16 %v416, %v415
        %v427 = vpack.c.b16 %v418, %v417
        %v428 = vpack.c.b16 %v420, %v419
        %vm429 = vcmask 64512
        %v431 = vsel %vm429, %v421, 0
        %v434 = vsel %vm429, %v422, 0
        %v437 = vsel %vm429, %v423, 0
        %v440 = vsel %vm429, %v424, 0
        %v443 = vsel %vm429, %v425, 0
        %v446 = vsel %vm429, %v426, 0
        %v449 = vsel %vm429, %v427, 0
        %v452 = vsel %vm429, %v428, 0
        %vm454 = vcmask 1043456
        %v456 = vsel %vm454, %v292, 0
        %458 = vmatprep.subr.bf16.mxu0 0
        %459 = vmatpush1.bf16.msra.mxu0 %v456
        %460 = vmatprep.subr.bf16.mxu0 0
        %461 = vmatpush1.bf16.msra.mxu0 0
        %462 = vmatprep.subr.bf16.mxu0 0
        %463 = vmatpush1.bf16.msra.mxu0 0
        %464 = vmatprep.subr.bf16.mxu0 0
        %465 = vmatpush1.bf16.msra.mxu0 0
        %466 = vmatprep.subr.bf16.mxu0 0
        %467 = vmatpush1.bf16.msra.mxu0 0
        %468 = vmatprep.subr.bf16.mxu0 0
        %469 = vmatpush1.bf16.msra.mxu0 0
        %470 = vmatprep.subr.bf16.mxu0 0
        %471 = vmatpush1.bf16.msra.mxu0 0
        %472 = vmatprep.subr.bf16.mxu0 0
        %473 = vmatpush1.bf16.msra.mxu0 0
        %474 = vmatprep.subr.bf16.mxu0 0
        %475 = vmatpush1.bf16.msra.mxu0 0
        %476 = vmatprep.subr.bf16.mxu0 0
        %477 = vmatpush1.bf16.msra.mxu0 0
        %478 = vmatprep.subr.bf16.mxu0 0
        %479 = vmatpush1.bf16.msra.mxu0 0
        %480 = vmatprep.subr.bf16.mxu0 0
        %481 = vmatpush1.bf16.msra.mxu0 0
        %482 = vmatprep.subr.bf16.mxu0 0
        %483 = vmatpush1.bf16.msra.mxu0 0
        %484 = vmatprep.subr.bf16.mxu0 0
        %485 = vmatpush1.bf16.msra.mxu0 0
        %486 = vmatprep.subr.bf16.mxu0 0
        %487 = vmatpush1.bf16.msra.mxu0 0
        %488 = vmatprep.subr.bf16.mxu0 0
        %489 = vmatpush1.bf16.msra.mxu0 0
        %490 = vmatprep.mubr.bf16.mxu0 0
        %491 = vmatmul.mubr.bf16.gmra.mrb[0].mxu0 %v431
        %v492 = vpop.f32.mrb[0].mxu0
        %v493 = vadd.f32 %v312, %v492
        %v494 = vpop.f32.mrb[0].mxu0
        %v495 = vpop.f32.mrb[0].mxu0
        %v496 = vadd.f32 %v317, %v495
        %v497 = vpop.f32.mrb[0].mxu0
        %498 = vmatprep.mubr.bf16.mxu0 0
        %499 = vmatmul.mubr.bf16.gmra.mrb[0].mxu0 %v434
        %v500 = vpop.f32.mrb[0].mxu0
        %v501 = vadd.f32 %v322, %v500
        %v502 = vpop.f32.mrb[0].mxu0
        %v503 = vpop.f32.mrb[0].mxu0
        %v504 = vadd.f32 %v327, %v503
        %v505 = vpop.f32.mrb[0].mxu0
        %506 = vmatprep.mubr.bf16.mxu0 0
        %507 = vmatmul.mubr.bf16.gmra.mrb[0].mxu0 %v437
        %v508 = vpop.f32.mrb[0].mxu0
        %v509 = vadd.f32 %v332, %v508
        %v510 = vpop.f32.mrb[0].mxu0
        %v511 = vpop.f32.mrb[0].mxu0
        %v512 = vadd.f32 %v337, %v511
        %v513 = vpop.f32.mrb[0].mxu0
        %514 = vmatprep.mubr.bf16.mxu0 0
        %515 = vmatmul.mubr.bf16.gmra.mrb[0].mxu0 %v440
        %v516 = vpop.f32.mrb[0].mxu0
        %v517 = vadd.f32 %v342, %v516
        %v518 = vpop.f32.mrb[0].mxu0
        %v519 = vpop.f32.mrb[0].mxu0
        %v520 = vadd.f32 %v347, %v519
        %v521 = vpop.f32.mrb[0].mxu0
        %522 = vmatprep.mubr.bf16.mxu0 0
        %523 = vmatmul.mubr.bf16.gmra.mrb[0].mxu0 %v443
        %v524 = vpop.f32.mrb[0].mxu0
        %v525 = vadd.f32 %v352, %v524
        %v526 = vpop.f32.mrb[0].mxu0
        %v527 = vpop.f32.mrb[0].mxu0
        %v528 = vadd.f32 %v357, %v527
        %v529 = vpop.f32.mrb[0].mxu0
        %530 = vmatprep.mubr.bf16.mxu0 0
        %531 = vmatmul.mubr.bf16.gmra.mrb[0].mxu0 %v446
        %v532 = vpop.f32.mrb[0].mxu0
        %v533 = vadd.f32 %v362, %v532
        %v534 = vpop.f32.mrb[0].mxu0
        %v535 = vpop.f32.mrb[0].mxu0
        %v536 = vadd.f32 %v367, %v535
        %v537 = vpop.f32.mrb[0].mxu0
        %538 = vmatprep.mubr.bf16.mxu0 0
        %539 = vmatmul.mubr.bf16.gmra.mrb[0].mxu0 %v449
        %v540 = vpop.f32.mrb[0].mxu0
        %v541 = vadd.f32 %v372, %v540
        %v542 = vpop.f32.mrb[0].mxu0
        %v543 = vpop.f32.mrb[0].mxu0
        %v544 = vadd.f32 %v377, %v543
        %v545 = vpop.f32.mrb[0].mxu0
        %546 = vmatprep.mubr.bf16.mxu0 0
        %547 = vmatmul.mubr.bf16.gmra.mrb[0].mxu0 %v452
        %v548 = vpop.f32.mrb[0].mxu0
        %v549 = vadd.f32 %v382, %v548
        %v550 = vpop.f32.mrb[0].mxu0
        %v551 = vpop.f32.mrb[0].mxu0
        %v552 = vadd.f32 %v387, %v551
        %v553 = vpop.f32.mrb[0].mxu0
        %554 = vdwg.mxu0
        %v555 = vmax.f32 %v493, 0.0
        %v556 = vmax.f32 %v496, 0.0
        %v557 = vmax.f32 %v501, 0.0
        %v558 = vmax.f32 %v504, 0.0
        %v559 = vmax.f32 %v509, 0.0
        %v560 = vmax.f32 %v512, 0.0
        %v561 = vmax.f32 %v517, 0.0
        %v562 = vmax.f32 %v520, 0.0
        %v563 = vmax.f32 %v525, 0.0
        %v564 = vmax.f32 %v528, 0.0
        %v565 = vmax.f32 %v533, 0.0
        %v566 = vmax.f32 %v536, 0.0
        %v567 = vmax.f32 %v541, 0.0
        %v568 = vmax.f32 %v544, 0.0
        %v569 = vmax.f32 %v549, 0.0
        %v570 = vmax.f32 %v552, 0.0
        %v571 = vld [vmem:[%s3] sm:$0xf]
        %v572 = vld [vmem:[%s3 + $0x4] sm:$0xf]
        %v573 = vld [vmem:[%s3 + $0x8] sm:$0xf]
        %v574 = vld [vmem:[%s3 + $0xc] sm:$0xf]
        %v575 = vld [vmem:[%s3 + $0x10] sm:$0xf]
        %v576 = vld [vmem:[%s3 + $0x14] sm:$0xf]
        %v577 = vld [vmem:[%s3 + $0x18] sm:$0xf]
        %v578 = vld [vmem:[%s3 + $0x1c] sm:$0xf]
        %v579 = vld [vmem:[%s3 + $0x20] sm:$0xf]
        %v580 = vld [vmem:[%s3 + $0x24] sm:$0xf]
        %v581 = vld [vmem:[%s3 + $0x28] sm:$0xf]
        %v582 = vld [vmem:[%s3 + $0x2c] sm:$0xf]
        %v583 = vld [vmem:[%s3 + $0x30] sm:$0xf]
        %v584 = vld [vmem:[%s3 + $0x34] sm:$0xf]
        %v585 = vld [vmem:[%s3 + $0x38] sm:$0xf]
        %v586 = vld [vmem:[%s3 + $0x3c] sm:$0xf]
        %v587 = vpack.c.bf16 %v556, %v555
        %v588 = vpack.c.bf16 %v558, %v557
        %v589 = vpack.c.bf16 %v560, %v559
        %v590 = vpack.c.bf16 %v562, %v561
        %v591 = vpack.c.bf16 %v564, %v563
        %v592 = vpack.c.bf16 %v566, %v565
        %v593 = vpack.c.bf16 %v568, %v567
        %v594 = vpack.c.bf16 %v570, %v569
        %v595 = vld [vmem:[%s4] sm:$0xff]
        %v596 = vld [vmem:[%s4 + $0x8] sm:$0xff]
        %v597 = vld [vmem:[%s4 + $0x10] sm:$0xff]
        %v598 = vld [vmem:[%s4 + $0x18] sm:$0xff]
        %v599 = vld [vmem:[%s4 + $0x20] sm:$0xff]
        %v600 = vld [vmem:[%s4 + $0x28] sm:$0xff]
        %v601 = vld [vmem:[%s4 + $0x30] sm:$0xff]
        %v602 = vld [vmem:[%s4 + $0x38] sm:$0xff]
        %v603 = vld [vmem:[%s4 + $0x40] sm:$0xff]
        %v604 = vld [vmem:[%s4 + $0x48] sm:$0xff]
        %v605 = vld [vmem:[%s4 + $0x50] sm:$0xff]
        %v606 = vld [vmem:[%s4 + $0x58] sm:$0xff]
        %v607 = vld [vmem:[%s4 + $0x60] sm:$0xff]
        %v608 = vld [vmem:[%s4 + $0x68] sm:$0xff]
        %v609 = vld [vmem:[%s4 + $0x70] sm:$0xff]
        %v610 = vld [vmem:[%s4 + $0x78] sm:$0xff]
        %612 = vset.pattern.permute.xlu0 0
        %613 = vperm.xlu0 %612, %v595
        %v614 = vpop.permute.xlu0 %613
        %617 = vset.pattern.permute.xlu0 0
        %618 = vperm.xlu0 %617, %v596
        %v619 = vpop.permute.xlu0 %618
        %622 = vset.pattern.permute.xlu0 0
        %623 = vperm.xlu0 %622, %v597
        %v624 = vpop.permute.xlu0 %623
        %627 = vset.pattern.permute.xlu0 0
        %628 = vperm.xlu0 %627, %v598
        %v629 = vpop.permute.xlu0 %628
        %632 = vset.pattern.permute.xlu0 0
        %633 = vperm.xlu0 %632, %v599
        %v634 = vpop.permute.xlu0 %633
        %637 = vset.pattern.permute.xlu0 0
        %638 = vperm.xlu0 %637, %v600
        %v639 = vpop.permute.xlu0 %638
        %642 = vset.pattern.permute.xlu0 0
        %643 = vperm.xlu0 %642, %v601
        %v644 = vpop.permute.xlu0 %643
        %647 = vset.pattern.permute.xlu0 0
        %648 = vperm.xlu0 %647, %v602
        %v649 = vpop.permute.xlu0 %648
        %652 = vset.pattern.permute.xlu0 0
        %653 = vperm.xlu0 %652, %v603
        %v654 = vpop.permute.xlu0 %653
        %657 = vset.pattern.permute.xlu0 0
        %658 = vperm.xlu0 %657, %v604
        %v659 = vpop.permute.xlu0 %658
        %662 = vset.pattern.permute.xlu0 0
        %663 = vperm.xlu0 %662, %v605
        %v664 = vpop.permute.xlu0 %663
        %667 = vset.pattern.permute.xlu0 0
        %668 = vperm.xlu0 %667, %v606
        %v669 = vpop.permute.xlu0 %668
        %672 = vset.pattern.permute.xlu0 0
        %673 = vperm.xlu0 %672, %v607
        %v674 = vpop.permute.xlu0 %673
        %677 = vset.pattern.permute.xlu0 0
        %678 = vperm.xlu0 %677, %v608
        %v679 = vpop.permute.xlu0 %678
        %682 = vset.pattern.permute.xlu0 0
        %683 = vperm.xlu0 %682, %v609
        %v684 = vpop.permute.xlu0 %683
        %687 = vset.pattern.permute.xlu0 0
        %688 = vperm.xlu0 %687, %v610
        %v689 = vpop.permute.xlu0 %688
        %v707 = vunpack.c.l.b16 %v571
        %v708 = vunpack.c.l.b16 %v572
        %v709 = vunpack.c.l.b16 %v573
        %v710 = vunpack.c.l.b16 %v574
        %v711 = vunpack.c.l.b16 %v575
        %v712 = vunpack.c.l.b16 %v576
        %v713 = vunpack.c.l.b16 %v577
        %v714 = vunpack.c.l.b16 %v578
        %v715 = vunpack.c.l.b16 %v579
        %v716 = vunpack.c.l.b16 %v580
        %v717 = vunpack.c.l.b16 %v581
        %v718 = vunpack.c.l.b16 %v582
        %v719 = vunpack.c.l.b16 %v583
        %v720 = vunpack.c.l.b16 %v584
        %v721 = vunpack.c.l.b16 %v585
        %v722 = vunpack.c.l.b16 %v586
        %v723 = vpack.c.b16 %v708, %v707
        %v724 = vpack.c.b16 %v710, %v709
        %v725 = vpack.c.b16 %v712, %v711
        %v726 = vpack.c.b16 %v714, %v713
        %v727 = vpack.c.b16 %v716, %v715
        %v728 = vpack.c.b16 %v718, %v717
        %v729 = vpack.c.b16 %v720, %v719
        %v730 = vpack.c.b16 %v722, %v721
        %739 = vmatprep.subr.bf16.mxu0 0
        %740 = vmatpush1.bf16.msra.mxu0 %v587
        %741 = vmatprep.subr.bf16.mxu0 0
        %742 = vmatpush1.bf16.msra.mxu0 %v588
        %743 = vmatprep.subr.bf16.mxu0 0
        %744 = vmatpush1.bf16.msra.mxu0 %v589
        %745 = vmatprep.subr.bf16.mxu0 0
        %746 = vmatpush1.bf16.msra.mxu0 %v590
        %747 = vmatprep.subr.bf16.mxu0 0
        %748 = vmatpush1.bf16.msra.mxu0 %v591
        %749 = vmatprep.subr.bf16.mxu0 0
        %750 = vmatpush1.bf16.msra.mxu0 %v592
        %751 = vmatprep.subr.bf16.mxu0 0
        %752 = vmatpush1.bf16.msra.mxu0 %v593
        %753 = vmatprep.subr.bf16.mxu0 0
        %754 = vmatpush1.bf16.msra.mxu0 %v594
        %755 = vmatprep.subr.bf16.mxu0 0
        %756 = vmatpush1.bf16.msra.mxu0 0
        %757 = vmatprep.subr.bf16.mxu0 0
        %758 = vmatpush1.bf16.msra.mxu0 0
        %759 = vmatprep.subr.bf16.mxu0 0
        %760 = vmatpush1.bf16.msra.mxu0 0
        %761 = vmatprep.subr.bf16.mxu0 0
        %762 = vmatpush1.bf16.msra.mxu0 0
        %763 = vmatprep.subr.bf16.mxu0 0
        %764 = vmatpush1.bf16.msra.mxu0 0
        %765 = vmatprep.subr.bf16.mxu0 0
        %766 = vmatpush1.bf16.msra.mxu0 0
        %767 = vmatprep.subr.bf16.mxu0 0
        %768 = vmatpush1.bf16.msra.mxu0 0
        %769 = vmatprep.subr.bf16.mxu0 0
        %770 = vmatpush1.bf16.msra.mxu0 0
        %771 = vmatprep.mubr.bf16.mxu0 0
        %772 = vmatmul.mubr.bf16.gmra.mrb[0].mxu0 %v723
        %v773 = vpop.f32.mrb[0].mxu0
        %v774 = vadd.f32 %v614, %v773
        %v775 = vpop.f32.mrb[0].mxu0
        %v776 = vpop.f32.mrb[0].mxu0
        %v777 = vadd.f32 %v619, %v776
        %v778 = vpop.f32.mrb[0].mxu0
        %779 = vmatprep.mubr.bf16.mxu0 0
        %780 = vmatmul.mubr.bf16.gmra.mrb[0].mxu0 %v724
        %v781 = vpop.f32.mrb[0].mxu0
        %v782 = vadd.f32 %v624, %v781
        %v783 = vpop.f32.mrb[0].mxu0
        %v784 = vpop.f32.mrb[0].mxu0
        %v785 = vadd.f32 %v629, %v784
        %v786 = vpop.f32.mrb[0].mxu0
        %787 = vmatprep.mubr.bf16.mxu0 0
        %788 = vmatmul.mubr.bf16.gmra.mrb[0].mxu0 %v725
        %v789 = vpop.f32.mrb[0].mxu0
        %v790 = vadd.f32 %v634, %v789
        %v791 = vpop.f32.mrb[0].mxu0
        %v792 = vpop.f32.mrb[0].mxu0
        %v793 = vadd.f32 %v639, %v792
        %v794 = vpop.f32.mrb[0].mxu0
        %795 = vmatprep.mubr.bf16.mxu0 0
        %796 = vmatmul.mubr.bf16.gmra.mrb[0].mxu0 %v726
        %v797 = vpop.f32.mrb[0].mxu0
        %v798 = vadd.f32 %v644, %v797
        %v799 = vpop.f32.mrb[0].mxu0
        %v800 = vpop.f32.mrb[0].mxu0
        %v801 = vadd.f32 %v649, %v800
        %v802 = vpop.f32.mrb[0].mxu0
        %803 = vmatprep.mubr.bf16.mxu0 0
        %804 = vmatmul.mubr.bf16.gmra.mrb[0].mxu0 %v727
        %v805 = vpop.f32.mrb[0].mxu0
        %v806 = vadd.f32 %v654, %v805
        %v807 = vpop.f32.mrb[0].mxu0
        %v808 = vpop.f32.mrb[0].mxu0
        %v809 = vadd.f32 %v659, %v808
        %v810 = vpop.f32.mrb[0].mxu0
        %811 = vmatprep.mubr.bf16.mxu0 0
        %812 = vmatmul.mubr.bf16.gmra.mrb[0].mxu0 %v728
        %v813 = vpop.f32.mrb[0].mxu0
        %v814 = vadd.f32 %v664, %v813
        %v815 = vpop.f32.mrb[0].mxu0
        %v816 = vpop.f32.mrb[0].mxu0
        %v817 = vadd.f32 %v669, %v816
        %v818 = vpop.f32.mrb[0].mxu0
        %819 = vmatprep.mubr.bf16.mxu0 0
        %820 = vmatmul.mubr.bf16.gmra.mrb[0].mxu0 %v729
        %v821 = vpop.f32.mrb[0].mxu0
        %v822 = vadd.f32 %v674, %v821
        %v823 = vpop.f32.mrb[0].mxu0
        %v824 = vpop.f32.mrb[0].mxu0
        %v825 = vadd.f32 %v679, %v824
        %v826 = vpop.f32.mrb[0].mxu0
        %827 = vmatprep.mubr.bf16.mxu0 0
        %828 = vmatmul.mubr.bf16.gmra.mrb[0].mxu0 %v730
        %v829 = vpop.f32.mrb[0].mxu0
        %v830 = vadd.f32 %v684, %v829
        %v831 = vpop.f32.mrb[0].mxu0
        %v832 = vpop.f32.mrb[0].mxu0
        %v833 = vadd.f32 %v689, %v832
        %v834 = vpop.f32.mrb[0].mxu0
        %835 = vdwg.mxu0
        %v836 = vmax.f32 %v774, 0.0
        %v837 = vmax.f32 %v777, 0.0
        %v838 = vmax.f32 %v782, 0.0
        %v839 = vmax.f32 %v785, 0.0
        %v840 = vmax.f32 %v790, 0.0
        %v841 = vmax.f32 %v793, 0.0
        %v842 = vmax.f32 %v798, 0.0
        %v843 = vmax.f32 %v801, 0.0
        %v844 = vmax.f32 %v806, 0.0
        %v845 = vmax.f32 %v809, 0.0
        %v846 = vmax.f32 %v814, 0.0
        %v847 = vmax.f32 %v817, 0.0
        %v848 = vmax.f32 %v822, 0.0
        %v849 = vmax.f32 %v825, 0.0
        %v850 = vmax.f32 %v830, 0.0
        %v851 = vmax.f32 %v833, 0.0
        %s852 = scalar_lea.vmem %s3, 64
        %v853 = vld [vmem:[%s852] sm:$0xf]
        %v854 = vld [vmem:[%s852 + $0x4] sm:$0xf]
        %v855 = vld [vmem:[%s852 + $0x8] sm:$0xf]
        %v856 = vld [vmem:[%s852 + $0xc] sm:$0xf]
        %v857 = vld [vmem:[%s852 + $0x10] sm:$0xf]
        %v858 = vld [vmem:[%s852 + $0x14] sm:$0xf]
        %v859 = vld [vmem:[%s852 + $0x18] sm:$0xf]
        %v860 = vld [vmem:[%s852 + $0x1c] sm:$0xf]
        %v861 = vld [vmem:[%s852 + $0x20] sm:$0xf]
        %v862 = vld [vmem:[%s852 + $0x24] sm:$0xf]
        %v863 = vld [vmem:[%s852 + $0x28] sm:$0xf]
        %v864 = vld [vmem:[%s852 + $0x2c] sm:$0xf]
        %v865 = vld [vmem:[%s852 + $0x30] sm:$0xf]
        %v866 = vld [vmem:[%s852 + $0x34] sm:$0xf]
        %v867 = vld [vmem:[%s852 + $0x38] sm:$0xf]
        %v868 = vld [vmem:[%s852 + $0x3c] sm:$0xf]
        %v869 = vpack.c.bf16 %v837, %v836
        %v870 = vpack.c.bf16 %v839, %v838
        %v871 = vpack.c.bf16 %v841, %v840
        %v872 = vpack.c.bf16 %v843, %v842
        %v873 = vpack.c.bf16 %v845, %v844
        %v874 = vpack.c.bf16 %v847, %v846
        %v875 = vpack.c.bf16 %v849, %v848
        %v876 = vpack.c.bf16 %v851, %v850
        %s877 = scalar_lea.vmem %s4, 128
        %v878 = vld [vmem:[%s877] sm:$0xff]
        %v879 = vld [vmem:[%s877 + $0x8] sm:$0xff]
        %v880 = vld [vmem:[%s877 + $0x10] sm:$0xff]
        %v881 = vld [vmem:[%s877 + $0x18] sm:$0xff]
        %v882 = vld [vmem:[%s877 + $0x20] sm:$0xff]
        %v883 = vld [vmem:[%s877 + $0x28] sm:$0xff]
        %v884 = vld [vmem:[%s877 + $0x30] sm:$0xff]
        %v885 = vld [vmem:[%s877 + $0x38] sm:$0xff]
        %v886 = vld [vmem:[%s877 + $0x40] sm:$0xff]
        %v887 = vld [vmem:[%s877 + $0x48] sm:$0xff]
        %v888 = vld [vmem:[%s877 + $0x50] sm:$0xff]
        %v889 = vld [vmem:[%s877 + $0x58] sm:$0xff]
        %v890 = vld [vmem:[%s877 + $0x60] sm:$0xff]
        %v891 = vld [vmem:[%s877 + $0x68] sm:$0xff]
        %v892 = vld [vmem:[%s877 + $0x70] sm:$0xff]
        %v893 = vld [vmem:[%s877 + $0x78] sm:$0xff]
        %895 = vset.pattern.permute.xlu0 0
        %896 = vperm.xlu0 %895, %v878
        %v897 = vpop.permute.xlu0 %896
        %900 = vset.pattern.permute.xlu0 0
        %901 = vperm.xlu0 %900, %v879
        %v902 = vpop.permute.xlu0 %901
        %905 = vset.pattern.permute.xlu0 0
        %906 = vperm.xlu0 %905, %v880
        %v907 = vpop.permute.xlu0 %906
        %910 = vset.pattern.permute.xlu0 0
        %911 = vperm.xlu0 %910, %v881
        %v912 = vpop.permute.xlu0 %911
        %915 = vset.pattern.permute.xlu0 0
        %916 = vperm.xlu0 %915, %v882
        %v917 = vpop.permute.xlu0 %916
        %920 = vset.pattern.permute.xlu0 0
        %921 = vperm.xlu0 %920, %v883
        %v922 = vpop.permute.xlu0 %921
        %925 = vset.pattern.permute.xlu0 0
        %926 = vperm.xlu0 %925, %v884
        %v927 = vpop.permute.xlu0 %926
        %930 = vset.pattern.permute.xlu0 0
        %931 = vperm.xlu0 %930, %v885
        %v932 = vpop.permute.xlu0 %931
        %935 = vset.pattern.permute.xlu0 0
        %936 = vperm.xlu0 %935, %v886
        %v937 = vpop.permute.xlu0 %936
        %940 = vset.pattern.permute.xlu0 0
        %941 = vperm.xlu0 %940, %v887
        %v942 = vpop.permute.xlu0 %941
        %945 = vset.pattern.permute.xlu0 0
        %946 = vperm.xlu0 %945, %v888
        %v947 = vpop.permute.xlu0 %946
        %950 = vset.pattern.permute.xlu0 0
        %951 = vperm.xlu0 %950, %v889
        %v952 = vpop.permute.xlu0 %951
        %955 = vset.pattern.permute.xlu0 0
        %956 = vperm.xlu0 %955, %v890
        %v957 = vpop.permute.xlu0 %956
        %960 = vset.pattern.permute.xlu0 0
        %961 = vperm.xlu0 %960, %v891
        %v962 = vpop.permute.xlu0 %961
        %965 = vset.pattern.permute.xlu0 0
        %966 = vperm.xlu0 %965, %v892
        %v967 = vpop.permute.xlu0 %966
        %970 = vset.pattern.permute.xlu0 0
        %971 = vperm.xlu0 %970, %v893
        %v972 = vpop.permute.xlu0 %971
        %v990 = vunpack.c.l.b16 %v853
        %v991 = vunpack.c.l.b16 %v854
        %v992 = vunpack.c.l.b16 %v855
        %v993 = vunpack.c.l.b16 %v856
        %v994 = vunpack.c.l.b16 %v857
        %v995 = vunpack.c.l.b16 %v858
        %v996 = vunpack.c.l.b16 %v859
        %v997 = vunpack.c.l.b16 %v860
        %v998 = vunpack.c.l.b16 %v861
        %v999 = vunpack.c.l.b16 %v862
        %v1000 = vunpack.c.l.b16 %v863
        %v1001 = vunpack.c.l.b16 %v864
        %v1002 = vunpack.c.l.b16 %v865
        %v1003 = vunpack.c.l.b16 %v866
        %v1004 = vunpack.c.l.b16 %v867
        %v1005 = vunpack.c.l.b16 %v868
        %v1006 = vpack.c.b16 %v991, %v990
        %v1007 = vpack.c.b16 %v993, %v992
        %v1008 = vpack.c.b16 %v995, %v994
        %v1009 = vpack.c.b16 %v997, %v996
        %v1010 = vpack.c.b16 %v999, %v998
        %v1011 = vpack.c.b16 %v1001, %v1000
        %v1012 = vpack.c.b16 %v1003, %v1002
        %v1013 = vpack.c.b16 %v1005, %v1004
        %1022 = vmatprep.subr.bf16.mxu0 0
        %1023 = vmatpush1.bf16.msra.mxu0 %v869
        %1024 = vmatprep.subr.bf16.mxu0 0
        %1025 = vmatpush1.bf16.msra.mxu0 %v870
        %1026 = vmatprep.subr.bf16.mxu0 0
        %1027 = vmatpush1.bf16.msra.mxu0 %v871
        %1028 = vmatprep.subr.bf16.mxu0 0
        %1029 = vmatpush1.bf16.msra.mxu0 %v872
        %1030 = vmatprep.subr.bf16.mxu0 0
        %1031 = vmatpush1.bf16.msra.mxu0 %v873
        %1032 = vmatprep.subr.bf16.mxu0 0
        %1033 = vmatpush1.bf16.msra.mxu0 %v874
        %1034 = vmatprep.subr.bf16.mxu0 0
        %1035 = vmatpush1.bf16.msra.mxu0 %v875
        %1036 = vmatprep.subr.bf16.mxu0 0
        %1037 = vmatpush1.bf16.msra.mxu0 %v876
        %1038 = vmatprep.subr.bf16.mxu0 0
        %1039 = vmatpush1.bf16.msra.mxu0 0
        %1040 = vmatprep.subr.bf16.mxu0 0
        %1041 = vmatpush1.bf16.msra.mxu0 0
        %1042 = vmatprep.subr.bf16.mxu0 0
        %1043 = vmatpush1.bf16.msra.mxu0 0
        %1044 = vmatprep.subr.bf16.mxu0 0
        %1045 = vmatpush1.bf16.msra.mxu0 0
        %1046 = vmatprep.subr.bf16.mxu0 0
        %1047 = vmatpush1.bf16.msra.mxu0 0
        %1048 = vmatprep.subr.bf16.mxu0 0
        %1049 = vmatpush1.bf16.msra.mxu0 0
        %1050 = vmatprep.subr.bf16.mxu0 0
        %1051 = vmatpush1.bf16.msra.mxu0 0
        %1052 = vmatprep.subr.bf16.mxu0 0
        %1053 = vmatpush1.bf16.msra.mxu0 0
        %1054 = vmatprep.mubr.bf16.mxu0 0
        %1055 = vmatmul.mubr.bf16.gmra.mrb[0].mxu0 %v1006
        %v1056 = vpop.f32.mrb[0].mxu0
        %v1057 = vadd.f32 %v897, %v1056
        %v1058 = vpop.f32.mrb[0].mxu0
        %v1059 = vpop.f32.mrb[0].mxu0
        %v1060 = vadd.f32 %v902, %v1059
        %v1061 = vpop.f32.mrb[0].mxu0
        %1062 = vmatprep.mubr.bf16.mxu0 0
        %1063 = vmatmul.mubr.bf16.gmra.mrb[0].mxu0 %v1007
        %v1064 = vpop.f32.mrb[0].mxu0
        %v1065 = vadd.f32 %v907, %v1064
        %v1066 = vpop.f32.mrb[0].mxu0
        %v1067 = vpop.f32.mrb[0].mxu0
        %v1068 = vadd.f32 %v912, %v1067
        %v1069 = vpop.f32.mrb[0].mxu0
        %1070 = vmatprep.mubr.bf16.mxu0 0
        %1071 = vmatmul.mubr.bf16.gmra.mrb[0].mxu0 %v1008
        %v1072 = vpop.f32.mrb[0].mxu0
        %v1073 = vadd.f32 %v917, %v1072
        %v1074 = vpop.f32.mrb[0].mxu0
        %v1075 = vpop.f32.mrb[0].mxu0
        %v1076 = vadd.f32 %v922, %v1075
        %v1077 = vpop.f32.mrb[0].mxu0
        %1078 = vmatprep.mubr.bf16.mxu0 0
        %1079 = vmatmul.mubr.bf16.gmra.mrb[0].mxu0 %v1009
        %v1080 = vpop.f32.mrb[0].mxu0
        %v1081 = vadd.f32 %v927, %v1080
        %v1082 = vpop.f32.mrb[0].mxu0
        %v1083 = vpop.f32.mrb[0].mxu0
        %v1084 = vadd.f32 %v932, %v1083
        %v1085 = vpop.f32.mrb[0].mxu0
        %1086 = vmatprep.mubr.bf16.mxu0 0
        %1087 = vmatmul.mubr.bf16.gmra.mrb[0].mxu0 %v1010
        %v1088 = vpop.f32.mrb[0].mxu0
        %v1089 = vadd.f32 %v937, %v1088
        %v1090 = vpop.f32.mrb[0].mxu0
        %v1091 = vpop.f32.mrb[0].mxu0
        %v1092 = vadd.f32 %v942, %v1091
        %v1093 = vpop.f32.mrb[0].mxu0
        %1094 = vmatprep.mubr.bf16.mxu0 0
        %1095 = vmatmul.mubr.bf16.gmra.mrb[0].mxu0 %v1011
        %v1096 = vpop.f32.mrb[0].mxu0
        %v1097 = vadd.f32 %v947, %v1096
        %v1098 = vpop.f32.mrb[0].mxu0
        %v1099 = vpop.f32.mrb[0].mxu0
        %v1100 = vadd.f32 %v952, %v1099
        %v1101 = vpop.f32.mrb[0].mxu0
        %1102 = vmatprep.mubr.bf16.mxu0 0
        %1103 = vmatmul.mubr.bf16.gmra.mrb[0].mxu0 %v1012
        %v1104 = vpop.f32.mrb[0].mxu0
        %v1105 = vadd.f32 %v957, %v1104
        %v1106 = vpop.f32.mrb[0].mxu0
        %v1107 = vpop.f32.mrb[0].mxu0
        %v1108 = vadd.f32 %v962, %v1107
        %v1109 = vpop.f32.mrb[0].mxu0
        %1110 = vmatprep.mubr.bf16.mxu0 0
        %1111 = vmatmul.mubr.bf16.gmra.mrb[0].mxu0 %v1013
        %v1112 = vpop.f32.mrb[0].mxu0
        %v1113 = vadd.f32 %v967, %v1112
        %v1114 = vpop.f32.mrb[0].mxu0
        %v1115 = vpop.f32.mrb[0].mxu0
        %v1116 = vadd.f32 %v972, %v1115
        %v1117 = vpop.f32.mrb[0].mxu0
        %1118 = vdwg.mxu0
        %v1119 = vmax.f32 %v1057, 0.0
        %v1120 = vmax.f32 %v1060, 0.0
        %v1121 = vmax.f32 %v1065, 0.0
        %v1122 = vmax.f32 %v1068, 0.0
        %v1123 = vmax.f32 %v1073, 0.0
        %v1124 = vmax.f32 %v1076, 0.0
        %v1125 = vmax.f32 %v1081, 0.0
        %v1126 = vmax.f32 %v1084, 0.0
        %v1127 = vmax.f32 %v1089, 0.0
        %v1128 = vmax.f32 %v1092, 0.0
        %v1129 = vmax.f32 %v1097, 0.0
        %v1130 = vmax.f32 %v1100, 0.0
        %v1131 = vmax.f32 %v1105, 0.0
        %v1132 = vmax.f32 %v1108, 0.0
        %v1133 = vmax.f32 %v1113, 0.0
        %v1134 = vmax.f32 %v1116, 0.0
        %s1135 = scalar_lea.vmem %s3, 128
        %v1136 = vld [vmem:[%s1135] sm:$0xf]
        %v1137 = vld [vmem:[%s1135 + $0x4] sm:$0xf]
        %v1138 = vld [vmem:[%s1135 + $0x8] sm:$0xf]
        %v1139 = vld [vmem:[%s1135 + $0xc] sm:$0xf]
        %v1140 = vld [vmem:[%s1135 + $0x10] sm:$0xf]
        %v1141 = vld [vmem:[%s1135 + $0x14] sm:$0xf]
        %v1142 = vld [vmem:[%s1135 + $0x18] sm:$0xf]
        %v1143 = vld [vmem:[%s1135 + $0x1c] sm:$0xf]
        %v1144 = vld [vmem:[%s1135 + $0x20] sm:$0xf]
        %v1145 = vld [vmem:[%s1135 + $0x24] sm:$0xf]
        %v1146 = vld [vmem:[%s1135 + $0x28] sm:$0xf]
        %v1147 = vld [vmem:[%s1135 + $0x2c] sm:$0xf]
        %v1148 = vld [vmem:[%s1135 + $0x30] sm:$0xf]
        %v1149 = vld [vmem:[%s1135 + $0x34] sm:$0xf]
        %v1150 = vld [vmem:[%s1135 + $0x38] sm:$0xf]
        %v1151 = vld [vmem:[%s1135 + $0x3c] sm:$0xf]
        %v1152 = vpack.c.bf16 %v1120, %v1119
        %v1153 = vpack.c.bf16 %v1122, %v1121
        %v1154 = vpack.c.bf16 %v1124, %v1123
        %v1155 = vpack.c.bf16 %v1126, %v1125
        %v1156 = vpack.c.bf16 %v1128, %v1127
        %v1157 = vpack.c.bf16 %v1130, %v1129
        %v1158 = vpack.c.bf16 %v1132, %v1131
        %v1159 = vpack.c.bf16 %v1134, %v1133
        %s1160 = scalar_lea.vmem %s4, 256
        %v1161 = vld [vmem:[%s1160] sm:$0xff]
        %v1162 = vld [vmem:[%s1160 + $0x8] sm:$0xff]
        %v1163 = vld [vmem:[%s1160 + $0x10] sm:$0xff]
        %v1164 = vld [vmem:[%s1160 + $0x18] sm:$0xff]
        %v1165 = vld [vmem:[%s1160 + $0x20] sm:$0xff]
        %v1166 = vld [vmem:[%s1160 + $0x28] sm:$0xff]
        %v1167 = vld [vmem:[%s1160 + $0x30] sm:$0xff]
        %v1168 = vld [vmem:[%s1160 + $0x38] sm:$0xff]
        %v1169 = vld [vmem:[%s1160 + $0x40] sm:$0xff]
        %v1170 = vld [vmem:[%s1160 + $0x48] sm:$0xff]
        %v1171 = vld [vmem:[%s1160 + $0x50] sm:$0xff]
        %v1172 = vld [vmem:[%s1160 + $0x58] sm:$0xff]
        %v1173 = vld [vmem:[%s1160 + $0x60] sm:$0xff]
        %v1174 = vld [vmem:[%s1160 + $0x68] sm:$0xff]
        %v1175 = vld [vmem:[%s1160 + $0x70] sm:$0xff]
        %v1176 = vld [vmem:[%s1160 + $0x78] sm:$0xff]
        %1178 = vset.pattern.permute.xlu0 0
        %1179 = vperm.xlu0 %1178, %v1161
        %v1180 = vpop.permute.xlu0 %1179
        %1183 = vset.pattern.permute.xlu0 0
        %1184 = vperm.xlu0 %1183, %v1162
        %v1185 = vpop.permute.xlu0 %1184
        %1188 = vset.pattern.permute.xlu0 0
        %1189 = vperm.xlu0 %1188, %v1163
        %v1190 = vpop.permute.xlu0 %1189
        %1193 = vset.pattern.permute.xlu0 0
        %1194 = vperm.xlu0 %1193, %v1164
        %v1195 = vpop.permute.xlu0 %1194
        %1198 = vset.pattern.permute.xlu0 0
        %1199 = vperm.xlu0 %1198, %v1165
        %v1200 = vpop.permute.xlu0 %1199
        %1203 = vset.pattern.permute.xlu0 0
        %1204 = vperm.xlu0 %1203, %v1166
        %v1205 = vpop.permute.xlu0 %1204
        %1208 = vset.pattern.permute.xlu0 0
        %1209 = vperm.xlu0 %1208, %v1167
        %v1210 = vpop.permute.xlu0 %1209
        %1213 = vset.pattern.permute.xlu0 0
        %1214 = vperm.xlu0 %1213, %v1168
        %v1215 = vpop.permute.xlu0 %1214
        %1218 = vset.pattern.permute.xlu0 0
        %1219 = vperm.xlu0 %1218, %v1169
        %v1220 = vpop.permute.xlu0 %1219
        %1223 = vset.pattern.permute.xlu0 0
        %1224 = vperm.xlu0 %1223, %v1170
        %v1225 = vpop.permute.xlu0 %1224
        %1228 = vset.pattern.permute.xlu0 0
        %1229 = vperm.xlu0 %1228, %v1171
        %v1230 = vpop.permute.xlu0 %1229
        %1233 = vset.pattern.permute.xlu0 0
        %1234 = vperm.xlu0 %1233, %v1172
        %v1235 = vpop.permute.xlu0 %1234
        %1238 = vset.pattern.permute.xlu0 0
        %1239 = vperm.xlu0 %1238, %v1173
        %v1240 = vpop.permute.xlu0 %1239
        %1243 = vset.pattern.permute.xlu0 0
        %1244 = vperm.xlu0 %1243, %v1174
        %v1245 = vpop.permute.xlu0 %1244
        %1248 = vset.pattern.permute.xlu0 0
        %1249 = vperm.xlu0 %1248, %v1175
        %v1250 = vpop.permute.xlu0 %1249
        %1253 = vset.pattern.permute.xlu0 0
        %1254 = vperm.xlu0 %1253, %v1176
        %v1255 = vpop.permute.xlu0 %1254
        %v1273 = vunpack.c.l.b16 %v1136
        %v1274 = vunpack.c.l.b16 %v1137
        %v1275 = vunpack.c.l.b16 %v1138
        %v1276 = vunpack.c.l.b16 %v1139
        %v1277 = vunpack.c.l.b16 %v1140
        %v1278 = vunpack.c.l.b16 %v1141
        %v1279 = vunpack.c.l.b16 %v1142
        %v1280 = vunpack.c.l.b16 %v1143
        %v1281 = vunpack.c.l.b16 %v1144
        %v1282 = vunpack.c.l.b16 %v1145
        %v1283 = vunpack.c.l.b16 %v1146
        %v1284 = vunpack.c.l.b16 %v1147
        %v1285 = vunpack.c.l.b16 %v1148
        %v1286 = vunpack.c.l.b16 %v1149
        %v1287 = vunpack.c.l.b16 %v1150
        %v1288 = vunpack.c.l.b16 %v1151
        %v1289 = vpack.c.b16 %v1274, %v1273
        %v1290 = vpack.c.b16 %v1276, %v1275
        %v1291 = vpack.c.b16 %v1278, %v1277
        %v1292 = vpack.c.b16 %v1280, %v1279
        %v1293 = vpack.c.b16 %v1282, %v1281
        %v1294 = vpack.c.b16 %v1284, %v1283
        %v1295 = vpack.c.b16 %v1286, %v1285
        %v1296 = vpack.c.b16 %v1288, %v1287
        %1305 = vmatprep.subr.bf16.mxu0 0
        %1306 = vmatpush1.bf16.msra.mxu0 %v1152
        %1307 = vmatprep.subr.bf16.mxu0 0
        %1308 = vmatpush1.bf16.msra.mxu0 %v1153
        %1309 = vmatprep.subr.bf16.mxu0 0
        %1310 = vmatpush1.bf16.msra.mxu0 %v1154
        %1311 = vmatprep.subr.bf16.mxu0 0
        %1312 = vmatpush1.bf16.msra.mxu0 %v1155
        %1313 = vmatprep.subr.bf16.mxu0 0
        %1314 = vmatpush1.bf16.msra.mxu0 %v1156
        %1315 = vmatprep.subr.bf16.mxu0 0
        %1316 = vmatpush1.bf16.msra.mxu0 %v1157
        %1317 = vmatprep.subr.bf16.mxu0 0
        %1318 = vmatpush1.bf16.msra.mxu0 %v1158
        %1319 = vmatprep.subr.bf16.mxu0 0
        %1320 = vmatpush1.bf16.msra.mxu0 %v1159
        %1321 = vmatprep.subr.bf16.mxu0 0
        %1322 = vmatpush1.bf16.msra.mxu0 0
        %1323 = vmatprep.subr.bf16.mxu0 0
        %1324 = vmatpush1.bf16.msra.mxu0 0
        %1325 = vmatprep.subr.bf16.mxu0 0
        %1326 = vmatpush1.bf16.msra.mxu0 0
        %1327 = vmatprep.subr.bf16.mxu0 0
        %1328 = vmatpush1.bf16.msra.mxu0 0
        %1329 = vmatprep.subr.bf16.mxu0 0
        %1330 = vmatpush1.bf16.msra.mxu0 0
        %1331 = vmatprep.subr.bf16.mxu0 0
        %1332 = vmatpush1.bf16.msra.mxu0 0
        %1333 = vmatprep.subr.bf16.mxu0 0
        %1334 = vmatpush1.bf16.msra.mxu0 0
        %1335 = vmatprep.subr.bf16.mxu0 0
        %1336 = vmatpush1.bf16.msra.mxu0 0
        %1337 = vmatprep.mubr.bf16.mxu0 0
        %1338 = vmatmul.mubr.bf16.gmra.mrb[0].mxu0 %v1289
        %v1339 = vpop.f32.mrb[0].mxu0
        %v1340 = vadd.f32 %v1180, %v1339
        %v1341 = vpop.f32.mrb[0].mxu0
        %v1342 = vpop.f32.mrb[0].mxu0
        %v1343 = vadd.f32 %v1185, %v1342
        %v1344 = vpop.f32.mrb[0].mxu0
        %1345 = vmatprep.mubr.bf16.mxu0 0
        %1346 = vmatmul.mubr.bf16.gmra.mrb[0].mxu0 %v1290
        %v1347 = vpop.f32.mrb[0].mxu0
        %v1348 = vadd.f32 %v1190, %v1347
        %v1349 = vpop.f32.mrb[0].mxu0
        %v1350 = vpop.f32.mrb[0].mxu0
        %v1351 = vadd.f32 %v1195, %v1350
        %v1352 = vpop.f32.mrb[0].mxu0
        %1353 = vmatprep.mubr.bf16.mxu0 0
        %1354 = vmatmul.mubr.bf16.gmra.mrb[0].mxu0 %v1291
        %v1355 = vpop.f32.mrb[0].mxu0
        %v1356 = vadd.f32 %v1200, %v1355
        %v1357 = vpop.f32.mrb[0].mxu0
        %v1358 = vpop.f32.mrb[0].mxu0
        %v1359 = vadd.f32 %v1205, %v1358
        %v1360 = vpop.f32.mrb[0].mxu0
        %1361 = vmatprep.mubr.bf16.mxu0 0
        %1362 = vmatmul.mubr.bf16.gmra.mrb[0].mxu0 %v1292
        %v1363 = vpop.f32.mrb[0].mxu0
        %v1364 = vadd.f32 %v1210, %v1363
        %v1365 = vpop.f32.mrb[0].mxu0
        %v1366 = vpop.f32.mrb[0].mxu0
        %v1367 = vadd.f32 %v1215, %v1366
        %v1368 = vpop.f32.mrb[0].mxu0
        %1369 = vmatprep.mubr.bf16.mxu0 0
        %1370 = vmatmul.mubr.bf16.gmra.mrb[0].mxu0 %v1293
        %v1371 = vpop.f32.mrb[0].mxu0
        %v1372 = vadd.f32 %v1220, %v1371
        %v1373 = vpop.f32.mrb[0].mxu0
        %v1374 = vpop.f32.mrb[0].mxu0
        %v1375 = vadd.f32 %v1225, %v1374
        %v1376 = vpop.f32.mrb[0].mxu0
        %1377 = vmatprep.mubr.bf16.mxu0 0
        %1378 = vmatmul.mubr.bf16.gmra.mrb[0].mxu0 %v1294
        %v1379 = vpop.f32.mrb[0].mxu0
        %v1380 = vadd.f32 %v1230, %v1379
        %v1381 = vpop.f32.mrb[0].mxu0
        %v1382 = vpop.f32.mrb[0].mxu0
        %v1383 = vadd.f32 %v1235, %v1382
        %v1384 = vpop.f32.mrb[0].mxu0
        %1385 = vmatprep.mubr.bf16.mxu0 0
        %1386 = vmatmul.mubr.bf16.gmra.mrb[0].mxu0 %v1295
        %v1387 = vpop.f32.mrb[0].mxu0
        %v1388 = vadd.f32 %v1240, %v1387
        %v1389 = vpop.f32.mrb[0].mxu0
        %v1390 = vpop.f32.mrb[0].mxu0
        %v1391 = vadd.f32 %v1245, %v1390
        %v1392 = vpop.f32.mrb[0].mxu0
        %1393 = vmatprep.mubr.bf16.mxu0 0
        %1394 = vmatmul.mubr.bf16.gmra.mrb[0].mxu0 %v1296
        %v1395 = vpop.f32.mrb[0].mxu0
        %v1396 = vadd.f32 %v1250, %v1395
        %v1397 = vpop.f32.mrb[0].mxu0
        %v1398 = vpop.f32.mrb[0].mxu0
        %v1399 = vadd.f32 %v1255, %v1398
        %v1400 = vpop.f32.mrb[0].mxu0
        %1401 = vdwg.mxu0
        %v1402 = vmax.f32 %v1340, 0.0
        %v1403 = vmax.f32 %v1343, 0.0
        %v1404 = vmax.f32 %v1348, 0.0
        %v1405 = vmax.f32 %v1351, 0.0
        %v1406 = vmax.f32 %v1356, 0.0
        %v1407 = vmax.f32 %v1359, 0.0
        %v1408 = vmax.f32 %v1364, 0.0
        %v1409 = vmax.f32 %v1367, 0.0
        %v1410 = vmax.f32 %v1372, 0.0
        %v1411 = vmax.f32 %v1375, 0.0
        %v1412 = vmax.f32 %v1380, 0.0
        %v1413 = vmax.f32 %v1383, 0.0
        %v1414 = vmax.f32 %v1388, 0.0
        %v1415 = vmax.f32 %v1391, 0.0
        %v1416 = vmax.f32 %v1396, 0.0
        %v1417 = vmax.f32 %v1399, 0.0
        %v1418 = vld [vmem:[%s5] sm:$0xff]
        %v1419 = vld [vmem:[%s5 + $0x8] sm:$0xff]
        %v1420 = vld [vmem:[%s5 + $0x10] sm:$0xff]
        %v1421 = vld [vmem:[%s5 + $0x18] sm:$0xff]
        %v1422 = vld [vmem:[%s5 + $0x20] sm:$0xff]
        %v1423 = vld [vmem:[%s5 + $0x28] sm:$0xff]
        %v1424 = vld [vmem:[%s5 + $0x30] sm:$0xff]
        %v1425 = vld [vmem:[%s5 + $0x38] sm:$0xff]
        %v1426 = vld [vmem:[%s5 + $0x40] sm:$0xff]
        %v1427 = vld [vmem:[%s5 + $0x48] sm:$0xff]
        %v1428 = vld [vmem:[%s5 + $0x50] sm:$0xff]
        %v1429 = vld [vmem:[%s5 + $0x58] sm:$0xff]
        %v1430 = vld [vmem:[%s5 + $0x60] sm:$0xff]
        %v1431 = vld [vmem:[%s5 + $0x68] sm:$0xff]
        %v1432 = vld [vmem:[%s5 + $0x70] sm:$0xff]
        %v1433 = vld [vmem:[%s5 + $0x78] sm:$0xff]
        %1435 = vset.pattern.permute.xlu0 0
        %1436 = vperm.xlu0 %1435, %v1418
        %v1437 = vpop.permute.xlu0 %1436
        %1440 = vset.pattern.permute.xlu0 0
        %1441 = vperm.xlu0 %1440, %v1419
        %v1442 = vpop.permute.xlu0 %1441
        %1445 = vset.pattern.permute.xlu0 0
        %1446 = vperm.xlu0 %1445, %v1420
        %v1447 = vpop.permute.xlu0 %1446
        %1450 = vset.pattern.permute.xlu0 0
        %1451 = vperm.xlu0 %1450, %v1421
        %v1452 = vpop.permute.xlu0 %1451
        %1455 = vset.pattern.permute.xlu0 0
        %1456 = vperm.xlu0 %1455, %v1422
        %v1457 = vpop.permute.xlu0 %1456
        %1460 = vset.pattern.permute.xlu0 0
        %1461 = vperm.xlu0 %1460, %v1423
        %v1462 = vpop.permute.xlu0 %1461
        %1465 = vset.pattern.permute.xlu0 0
        %1466 = vperm.xlu0 %1465, %v1424
        %v1467 = vpop.permute.xlu0 %1466
        %1470 = vset.pattern.permute.xlu0 0
        %1471 = vperm.xlu0 %1470, %v1425
        %v1472 = vpop.permute.xlu0 %1471
        %1475 = vset.pattern.permute.xlu0 0
        %1476 = vperm.xlu0 %1475, %v1426
        %v1477 = vpop.permute.xlu0 %1476
        %1480 = vset.pattern.permute.xlu0 0
        %1481 = vperm.xlu0 %1480, %v1427
        %v1482 = vpop.permute.xlu0 %1481
        %1485 = vset.pattern.permute.xlu0 0
        %1486 = vperm.xlu0 %1485, %v1428
        %v1487 = vpop.permute.xlu0 %1486
        %1490 = vset.pattern.permute.xlu0 0
        %1491 = vperm.xlu0 %1490, %v1429
        %v1492 = vpop.permute.xlu0 %1491
        %1495 = vset.pattern.permute.xlu0 0
        %1496 = vperm.xlu0 %1495, %v1430
        %v1497 = vpop.permute.xlu0 %1496
        %1500 = vset.pattern.permute.xlu0 0
        %1501 = vperm.xlu0 %1500, %v1431
        %v1502 = vpop.permute.xlu0 %1501
        %1505 = vset.pattern.permute.xlu0 0
        %1506 = vperm.xlu0 %1505, %v1432
        %v1507 = vpop.permute.xlu0 %1506
        %1510 = vset.pattern.permute.xlu0 0
        %1511 = vperm.xlu0 %1510, %v1433
        %v1512 = vpop.permute.xlu0 %1511
        %v1514 = vmul.f32 %v1437, %v1402
        %v1515 = vmul.f32 %v1442, %v1403
        %v1516 = vmul.f32 %v1447, %v1404
        %v1517 = vmul.f32 %v1452, %v1405
        %v1518 = vmul.f32 %v1457, %v1406
        %v1519 = vmul.f32 %v1462, %v1407
        %v1520 = vmul.f32 %v1467, %v1408
        %v1521 = vmul.f32 %v1472, %v1409
        %v1522 = vmul.f32 %v1477, %v1410
        %v1523 = vmul.f32 %v1482, %v1411
        %v1524 = vmul.f32 %v1487, %v1412
        %v1525 = vmul.f32 %v1492, %v1413
        %v1526 = vmul.f32 %v1497, %v1414
        %v1527 = vmul.f32 %v1502, %v1415
        %v1528 = vmul.f32 %v1507, %v1416
        %v1529 = vmul.f32 %v1512, %v1417
        %v1530 = vadd.f32 %v1514, %v1515
        %v1531 = vadd.f32 %v1530, %v1516
        %v1532 = vadd.f32 %v1531, %v1517
        %v1533 = vadd.f32 %v1532, %v1518
        %v1534 = vadd.f32 %v1533, %v1519
        %v1535 = vadd.f32 %v1534, %v1520
        %v1536 = vadd.f32 %v1535, %v1521
        %v1537 = vadd.f32 %v1536, %v1522
        %v1538 = vadd.f32 %v1537, %v1523
        %v1539 = vadd.f32 %v1538, %v1524
        %v1540 = vadd.f32 %v1539, %v1525
        %v1541 = vadd.f32 %v1540, %v1526
        %v1542 = vadd.f32 %v1541, %v1527
        %v1543 = vadd.f32 %v1542, %v1528
        %v1544 = vadd.f32 %v1543, %v1529
        %v1545 = vrot.slane %v1544, 4
        %v1546 = vadd.f32 %v1544, %v1545
        %v1547 = vrot.slane %v1546, 2
        %v1548 = vadd.f32 %v1546, %v1547
        %v1549 = vrot.slane %v1548, 1
        %v1550 = vadd.f32 %v1548, %v1549
        %v1551 = vld [vmem:[#allocation2] sm:$0x1]
        %1553 = vset.pattern.permute.xlu0 0
        %1554 = vperm.xlu0 %1553, %v1551
        %v1555 = vpop.permute.xlu0 %1554
        %v1557 = vlaneseq
        %v1558 = vshrl.u32 %v1557, 7
        %v1559 = vsub.s32 0, %v1558
        %v1560 = vrot.slane %v1555, %v1559
        %v1561 = vadd.f32 %v1550, %v1560
        %1562 = vst [vmem:[%s270] sm:$0x1] %v1561
        %s1563 = sand.u32 %s183, 1
        %s1564 = scalar_lea.sflag [#allocation4], %s1563
        %s1565 = sand.u32 %s183, 1
        %s1566 = scalar_lea.vmem [#allocation3], %s1565
        // Predicated region
        $region49: #{net_forward.1} parent=47 // pred_check
          %p1567 = pneg %p193
        $region50: #{net_forward.1} parent=47 // pred_check_branch
          %1569 = sbr.rel (%p1567) target = $region52
        $region51: #{net_forward.1} parent=47 // pred_region
          %s1571 = ssub.s32 16, 16
          %1572 = vsyncadd %s1564, %s1571
          %s1573 = smul.addr %s23, 16
          %s1574 = scalar_lea.hbm %s7, %s1573
          %s1576 = sshll.u32 %s1566, 4
          %s1577 = int_to_ptr.vmem [resolvable:$true] %s1576
          %1579 = dma.vmem_to_hbm [thread:$0]  %s1577, 16, %s1574, %s1564
        $region52: #{net_forward.1} parent=47 // pred_fallthru
          _
      $region48: #{net_forward.1} parent=5 // pred_fallthru
        _
      %p1580 = scmp.le.s32.totalorder 2, %s18
      // Predicated region
      $region53: #{net_forward.1} parent=5 // pred_check
        %p1581 = pneg %p1580
      $region54: #{net_forward.1} parent=5 // pred_check_branch
        %1583 = sbr.rel (%p1581) target = $region56
      $region55: #{net_forward.1} parent=5 // pred_region
        %s1584 = ssub.s32 %s18, 2
        // Predicated region
        $region57: #{net_forward.1} parent=55 // pred_check
          %p1585 = pneg %p199
        $region58: #{net_forward.1} parent=55 // pred_check_branch
          %1587 = sbr.rel (%p1585) target = $region60
        $region59: #{net_forward.1} parent=55 // pred_region
          %s1588 = sand.u32 %s184, 1
          %s1589 = scalar_lea.sflag [#allocation4], %s1588
          %s1590 = sand.u32 %s184, 1
          %s1591 = scalar_lea.vmem [#allocation3], %s1590
          %1592 = dma.done %s1589, 16
        $region60: #{net_forward.1} parent=55 // pred_fallthru
          _
      $region56: #{net_forward.1} parent=5 // pred_fallthru
        _
    $region6: #{net_forward.1} parent=1 // loop_footer
      %s22 = sadd.s32 1, %s18
    $region7: #{net_forward.1} parent=1 // loop_footer_branch
      %17 = sbr.rel target = $region3
    $region8: #{net_forward.1} parent=1 // loop_exit
      _
    %1593 = vsyncpa [#allocation4], 1
    %s1594 = scalar_lea.sflag [#allocation4], 1
    %1595 = vsyncpa %s1594, 1

</llo_original>
